<compile_context>
chip_gen: v7x
topology: tpu7x:2x2x1
jax: 0.10.0
libtpu: 0.0.40
codegen_flags: <defaults>
</compile_context>

<pallas_src>
import numpy as np
import jax
import jax.numpy as jnp
from jax import lax
from jax.experimental import pallas as pl
from jax.experimental.pallas import tpu as pltpu

PRED_PAD = 128  # lane width of the prediction matmul (HBM store is unpadded)


# -----------------------------------------------------------------------------
# Tiling helpers
# -----------------------------------------------------------------------------
def _round_up(x, m):
    return (x + m - 1) // m * m


def _cdiv(a, b):
    return -(-a // b)


def _choose_tiling(B, block_b):
    """Pick (TB, B_pad).

    TB is a multiple of 8 (sublane rule for the (TB, OUT) output block).  For
    batches large enough to split, the grid is forced to an even number of
    >= 2 steps so the 'parallel' batch axis can be sharded across v7x's two
    TensorCores (no effect on v5e/v6e).  Padding is at most a few rows.
    """
    B8 = _round_up(B, 8)
    if B8 <= 16:
        return B8, B8                      # one small step; splitting not worth it
    steps = max(2, _cdiv(B8, block_b))
    if steps % 2:
        steps += 1                         # even grid -> both v7x TensorCores busy
    TB = _round_up(_cdiv(B8, steps), 8)
    return TB, TB * steps


# -----------------------------------------------------------------------------
# Pallas kernel
# -----------------------------------------------------------------------------
def make_kernel(TB: int, N: int, F_in: int, D: int, OUT: int):
    bf16 = jnp.bfloat16

    def kernel(x_ref,
               w_in,      # (2, F_in, D)  bf16  [ego_w1, oth_w1]
               w_dd,      # (9, D, D)     bf16  [ew2, ew3, ow2, ow3, wq, wc, hw1, hw2, hw3]
               w_kv,      # (D, 2D)       bf16  concat(wk, wv)
               b_all,     # (9, D)        f32   [eb1, eb2, eb3, ob1, ob2, ob3, hb1, hb2, hb3]
               w_p,       # (D, PRED_PAD) bf16  zero-padded prediction weight
               b_p,       # (1, PRED_PAD) f32   zero-padded prediction bias
               m_blk,     # (D, D)        bf16  per-head block matrix * 1/sqrt(fph)
               out_ref):  # (TB, OUT)     f32
        xs = x_ref[...]                                   # (TB, N, F_in) f32
        mask3 = xs[:, :, 0:1] < 0.5                       # presence mask (TB, N, 1)

        def bias(i):
            return b_all[i:i + 1, :]                      # (1, D) f32

        def mlp3(h, w1, b1, w2, b2, w3, b3):
            # bf16 matmul operands, f32 accumulate; relu/bias stay f32.
            h = jnp.maximum(jnp.dot(h.astype(bf16), w1,
                                    preferred_element_type=jnp.float32) + b1, 0.0)
            h = jnp.maximum(jnp.dot(h.astype(bf16), w2,
                                    preferred_element_type=jnp.float32) + b2, 0.0)
            h = jnp.maximum(jnp.dot(h.astype(bf16), w3,
                                    preferred_element_type=jnp.float32) + b3, 0.0)
            return h

        # Others-embedding MLP over ALL N entity rows (row 0 replaced below).
        x_flat = xs.reshape(TB * N, F_in)
        oth = mlp3(x_flat, w_in[1], bias(3), w_dd[2], bias(4), w_dd[3], bias(5))   # (TB*N, D)

        # Ego-embedding MLP on the ego rows, derived in-kernel from the same tile.
        ego_e = mlp3(xs[:, 0, :], w_in[0], bias(0), w_dd[0], bias(1), w_dd[1], bias(2))  # (TB, D)

        # all_e[b, 0] = ego_e[b], all_e[b, n>0] = others embedding — cheap VPU select.
        ent = lax.broadcasted_iota(jnp.int32, (TB, N, 1), 1)
        all_e = jnp.where(ent == 0, ego_e[:, None, :], oth.reshape(TB, N, D))      # (TB, N, D)

        # Fused K/V projection (one 128-wide matmul), ego query projection.
        kv = jnp.dot(all_e.reshape(TB * N, D).astype(bf16), w_kv[...],
                     preferred_element_type=jnp.float32)                           # (TB*N, 2D)
        k3 = kv[:, :D].reshape(TB, N, D)
        v3 = kv[:, D:].reshape(TB, N, D)
        q = jnp.dot(ego_e.astype(bf16), w_dd[4],
                    preferred_element_type=jnp.float32)                            # (TB, D)

        # Per-head scores via block-diagonal matrix (scale folded in); the MXU
        # does the per-head reduction, results broadcast across each head's lanes.
        qk = (k3 * q[:, None, :]).reshape(TB * N, D)
        s = jnp.dot(qk.astype(bf16), m_blk[...],
                    preferred_element_type=jnp.float32).reshape(TB, N, D)
        s = jnp.where(mask3, -1000000000.0, s)

        # Softmax over entities (axis 1); EUP approx reciprocal for the denom.
        m = jnp.max(s, axis=1, keepdims=True)             # (TB, 1, D)
        e = jnp.exp(s - m)
        denom = jnp.sum(e, axis=1, keepdims=True)
        p = e * pl.reciprocal(denom, approx=True)         # (TB, N, D)

        att = jnp.sum(p * v3, axis=1)                     # (TB, D) heads already interleaved
        comb = jnp.dot(att.astype(bf16), w_dd[5], preferred_element_type=jnp.float32)
        res = (comb + ego_e) * 0.5                        # residual-average with embedded ego

        hh = mlp3(res, w_dd[6], bias(6), w_dd[7], bias(7), w_dd[8], bias(8))       # (TB, D)
        pred = jnp.dot(hh.astype(bf16), w_p[...],
                       preferred_element_type=jnp.float32) + b_p[...]              # (TB, PRED_PAD)
        out_ref[...] = pred[:, :OUT]                      # store only OUT lanes to HBM

    return kernel


# -----------------------------------------------------------------------------
# One-time parameter packing (hoisted out of the per-call path)
# -----------------------------------------------------------------------------
def pack_params(params, num_heads, fph):
    f32, bf16 = jnp.float32, jnp.bfloat16
    D = num_heads * fph
    OUT = params['pb'].shape[-1]

    w_in = jnp.stack([params['ew1'], params['ow1']]).astype(bf16)               # (2, F_in, D)
    w_dd = jnp.stack([params['ew2'], params['ew3'],
                      params['ow2'], params['ow3'],
                      params['wq'], params['wc'],
                      params['hw1'], params['hw2'], params['hw3']]).astype(bf16)  # (9, D, D)
    w_kv = jnp.concatenate([params['wk'], params['wv']], axis=1).astype(bf16)   # (D, 2D)
    b_all = jnp.concatenate([params['eb1'], params['eb2'], params['eb3'],
                             params['ob1'], params['ob2'], params['ob3'],
                             params['hb1'], params['hb2'], params['hb3']],
                            axis=0).astype(f32)                                 # (9, D)
    w_p = jnp.zeros((D, PRED_PAD), bf16).at[:, :OUT].set(params['pw'].astype(bf16))
    b_p = jnp.zeros((1, PRED_PAD), f32).at[:, :OUT].set(params['pb'].astype(f32))

    head_id = np.arange(D) // fph
    m_blk = jnp.asarray((head_id[:, None] == head_id[None, :]).astype(np.float32)
                        / np.sqrt(fph), dtype=bf16)                             # (D, D)

    return dict(w_in=w_in, w_dd=w_dd, w_kv=w_kv, b_all=b_all,
                w_p=w_p, b_p=b_p, m_blk=m_blk, D=D, OUT=OUT)


# -----------------------------------------------------------------------------
# Wrapper
# -----------------------------------------------------------------------------
def social_attention_forward(x, packed, block_b=1024):
    # block_b: rows per grid step. Default 1024 stays well under v7x's 64 MiB
    # VMEM; v5e/v6e (128 MiB) can raise to ~2048 together with vmem_limit_bytes.
    x = x.astype(jnp.float32)
    B, N, F_in = x.shape
    D, OUT = packed['D'], packed['OUT']

    TB, B_pad = _choose_tiling(B, block_b)
    if B_pad > B:
        # TODO(synk): for very large non-divisible B, run the ragged tail as a
        # second small call instead of re-materializing the padded input in HBM.
        x = jnp.pad(x, ((0, B_pad - B), (0, 0), (0, 0)))
    steps = B_pad // TB

    weight_args = (packed['w_in'], packed['w_dd'], packed['w_kv'], packed['b_all'],
                   packed['w_p'], packed['b_p'], packed['m_blk'])

    def const_spec(a):
        nd = a.ndim
        return pl.BlockSpec(a.shape, lambda b, _nd=nd: (0,) * _nd)

    in_specs = [pl.BlockSpec((TB, N, F_in), lambda b: (b, 0, 0))] + \
               [const_spec(a) for a in weight_args]
    out_specs = pl.BlockSpec((TB, OUT), lambda b: (b, 0))

    out = pl.pallas_call(
        make_kernel(TB, N, F_in, D, OUT),
        out_shape=jax.ShapeDtypeStruct((B_pad, OUT), jnp.float32),
        grid_spec=pltpu.PrefetchScalarGridSpec(
            num_scalar_prefetch=0,
            grid=(steps,),
            in_specs=in_specs,
            out_specs=out_specs,
        ),
        compiler_params=pltpu.CompilerParams(
            dimension_semantics=("parallel",),
            vmem_limit_bytes=48 * 1024 * 1024,   # above default scoped limit, below all physical
        ),
    )(x, *weight_args)

    return out[:B]                                        # (B, OUT)


# -----------------------------------------------------------------------------
# Pure-JAX reference (mirrors the PyTorch forward exactly, f32)
# -----------------------------------------------------------------------------
def reference(x, p, num_heads, fph):
    B, N, _ = x.shape
    D = num_heads * fph
    mask = x[:, :, 0:1] < 0.5
    ego = x[:, 0:1, :]
    others = x[:, 1:, :]

    def mlp3(h, w1, b1, w2, b2, w3, b3):
        h = jax.nn.relu(h @ w1 + b1)
        h = jax.nn.relu(h @ w2 + b2)
        h = jax.nn.relu(h @ w3 + b3)
        return h

    ego_e = mlp3(ego, p['ew1'], p['eb1'], p['ew2'], p['eb2'], p['ew3'], p['eb3'])
    oth_e = mlp3(others, p['ow1'], p['ob1'], p['ow2'], p['ob2'], p['ow3'], p['ob3'])
    all_e = jnp.concatenate([ego_e, oth_e], axis=1)

    K = (all_e @ p['wk']).reshape(B, N, num_heads, fph).transpose(0, 2, 1, 3)
    V = (all_e @ p['wv']).reshape(B, N, num_heads, fph).transpose(0, 2, 1, 3)
    Q = (ego_e @ p['wq']).reshape(B, 1, num_heads, fph).transpose(0, 2, 1, 3)

    scores = jnp.einsum('bhqf,bhkf->bhqk', Q, K) / np.sqrt(fph)
    scores = jnp.where(mask.reshape(B, 1, 1, N), -1000000000.0, scores)
    pattn = jax.nn.softmax(scores, axis=-1)
    val = jnp.einsum('bhqk,bhkf->bhqf', pattn, V).reshape(B, D)

    comb = val @ p['wc']
    res = (comb + ego_e[:, 0, :]) / 2.0
    hh = mlp3(res, p['hw1'], p['hb1'], p['hw2'], p['hb2'], p['hw3'], p['hb3'])
    return hh @ p['pw'] + p['pb']


# -----------------------------------------------------------------------------
# Main
# -----------------------------------------------------------------------------
if __name__ == "__main__":
    B, N, F_in = 4, 8, 8          # batch, entities (ego + 7 others), input features
    D, H, OUT = 64, 4, 5          # attention feature_size, heads, action count
    FPH = D // H

    key = jax.random.PRNGKey(0)
    keys = list(jax.random.split(key, 32))
    ki = iter(keys)

    def xavier(k, shape):
        bound = np.sqrt(6.0 / (shape[0] + shape[1]))
        return jax.random.uniform(k, shape, jnp.float32, -bound, bound)

    def bias(k, n):
        return 0.01 * jax.random.normal(k, (1, n), jnp.float32)

    params = {
        'ew1': xavier(next(ki), (F_in, D)), 'eb1': bias(next(ki), D),
        'ew2': xavier(next(ki), (D, D)),    'eb2': bias(next(ki), D),
        'ew3': xavier(next(ki), (D, D)),    'eb3': bias(next(ki), D),
        'ow1': xavier(next(ki), (F_in, D)), 'ob1': bias(next(ki), D),
        'ow2': xavier(next(ki), (D, D)),    'ob2': bias(next(ki), D),
        'ow3': xavier(next(ki), (D, D)),    'ob3': bias(next(ki), D),
        'wq': xavier(next(ki), (D, D)),
        'wk': xavier(next(ki), (D, D)),
        'wv': xavier(next(ki), (D, D)),
        'wc': xavier(next(ki), (D, D)),
        'hw1': xavier(next(ki), (D, D)), 'hb1': bias(next(ki), D),
        'hw2': xavier(next(ki), (D, D)), 'hb2': bias(next(ki), D),
        'hw3': xavier(next(ki), (D, D)), 'hb3': bias(next(ki), D),
        'pw': xavier(next(ki), (D, OUT)), 'pb': bias(next(ki), OUT),
    }

    # Deterministic input: feature 0 is the presence flag, ego always present.
    kx1, kx2 = jax.random.split(next(ki))
    feats = jax.random.normal(kx1, (B, N, F_in - 1), jnp.float32)
    presence = (jax.random.uniform(kx2, (B, N, 1)) > 0.4).astype(jnp.float32)
    presence = presence.at[:, 0, :].set(1.0)
    x = jnp.concatenate([presence, feats], axis=-1)   # (B, N, F_in)

    packed = pack_params(params, H, FPH)              # one-time weight packing (bf16)
    y = social_attention_forward(x, packed)
    y = jax.block_until_ready(y)

    y_ref = reference(x, params, H, FPH)
    assert y.shape == (B, OUT)
    assert bool(jnp.all(jnp.isfinite(y)))
    # bf16 matmul operands (f32 accumulate) + approx-reciprocal softmax -> loose tolerance
    assert jnp.allclose(y, y_ref, atol=5e-2, rtol=5e-2), (y, y_ref)

    print("KERNEL_OK")
</pallas_src>

<mosaic_0001>
module attributes {stable_mosaic.version = 11 : i64} {
  func.func @kernel(%arg0: i32, %arg1: memref<8x8x8xf32, #tpu.memory_space<vmem>>, %arg2: memref<2x8x64xbf16, #tpu.memory_space<vmem>>, %arg3: memref<9x64x64xbf16, #tpu.memory_space<vmem>>, %arg4: memref<64x128xbf16, #tpu.memory_space<vmem>>, %arg5: memref<9x64xf32, #tpu.memory_space<vmem>>, %arg6: memref<64x128xbf16, #tpu.memory_space<vmem>>, %arg7: memref<1x128xf32, #tpu.memory_space<vmem>>, %arg8: memref<64x64xbf16, #tpu.memory_space<vmem>>, %arg9: memref<8x5xf32, #tpu.memory_space<vmem>>) attributes {dimension_semantics = [#tpu.dimension_semantics<parallel>], iteration_bounds = array<i64: 1>, scalar_prefetch = 0 : i64, scratch_operands = 0 : i64, tpu.core_type = #tpu.core_type<tc>, window_params = [{transform_indices = @transform_0, window_bounds = array<i64: 8, 8, 8>}, {pipeline_mode = #tpu.pipeline_mode<synchronous>, transform_indices = @transform_1, window_bounds = array<i64: 2, 8, 64>}, {pipeline_mode = #tpu.pipeline_mode<synchronous>, transform_indices = @transform_2, window_bounds = array<i64: 9, 64, 64>}, {pipeline_mode = #tpu.pipeline_mode<synchronous>, transform_indices = @transform_3, window_bounds = array<i64: 64, 128>}, {pipeline_mode = #tpu.pipeline_mode<synchronous>, transform_indices = @transform_4, window_bounds = array<i64: 9, 64>}, {pipeline_mode = #tpu.pipeline_mode<synchronous>, transform_indices = @transform_5, window_bounds = array<i64: 64, 128>}, {pipeline_mode = #tpu.pipeline_mode<synchronous>, transform_indices = @transform_6, window_bounds = array<i64: 1, 128>}, {pipeline_mode = #tpu.pipeline_mode<synchronous>, transform_indices = @transform_7, window_bounds = array<i64: 64, 64>}, {transform_indices = @transform_8, window_bounds = array<i64: 8, 5>}]} {
    %c0 = arith.constant 0 : index
    %c0_0 = arith.constant 0 : index
    %c0_1 = arith.constant 0 : index
    %0 = vector.load %arg1[%c0, %c0_0, %c0_1] : memref<8x8x8xf32, #tpu.memory_space<vmem>>, vector<8x8x8xf32>
    %1 = vector.extract_strided_slice %0 {offsets = [0, 0, 0], sizes = [8, 8, 1], strides = [1, 1, 1]} : vector<8x8x8xf32> to vector<8x8x1xf32>
    %cst = arith.constant 5.000000e-01 : f32
    %2 = vector.broadcast %cst : f32 to vector<8x8x1xf32>
    %3 = arith.cmpf olt, %1, %2 : vector<8x8x1xf32>
    %4 = vector.shape_cast %0 : vector<8x8x8xf32> to vector<64x8xf32>
    %c1 = arith.constant 1 : index
    %c0_2 = arith.constant 0 : index
    %c0_3 = arith.constant 0 : index
    %5 = vector.load %arg2[%c1, %c0_2, %c0_3] : memref<2x8x64xbf16, #tpu.memory_space<vmem>>, vector<1x8x64xbf16>
    %6 = vector.shape_cast %5 : vector<1x8x64xbf16> to vector<8x64xbf16>
    %c3 = arith.constant 3 : index
    %c0_4 = arith.constant 0 : index
    %7 = vector.load %arg5[%c3, %c0_4] : memref<9x64xf32, #tpu.memory_space<vmem>>, vector<1x64xf32>
    %c2 = arith.constant 2 : index
    %c0_5 = arith.constant 0 : index
    %c0_6 = arith.constant 0 : index
    %8 = vector.load %arg3[%c2, %c0_5, %c0_6] : memref<9x64x64xbf16, #tpu.memory_space<vmem>>, vector<1x64x64xbf16>
    %9 = vector.shape_cast %8 : vector<1x64x64xbf16> to vector<64x64xbf16>
    %c4 = arith.constant 4 : index
    %c0_7 = arith.constant 0 : index
    %10 = vector.load %arg5[%c4, %c0_7] : memref<9x64xf32, #tpu.memory_space<vmem>>, vector<1x64xf32>
    %c3_8 = arith.constant 3 : index
    %c0_9 = arith.constant 0 : index
    %c0_10 = arith.constant 0 : index
    %11 = vector.load %arg3[%c3_8, %c0_9, %c0_10] : memref<9x64x64xbf16, #tpu.memory_space<vmem>>, vector<1x64x64xbf16>
    %12 = vector.shape_cast %11 : vector<1x64x64xbf16> to vector<64x64xbf16>
    %c5 = arith.constant 5 : index
    %c0_11 = arith.constant 0 : index
    %13 = vector.load %arg5[%c5, %c0_11] : memref<9x64xf32, #tpu.memory_space<vmem>>, vector<1x64xf32>
    %14 = arith.truncf %4 : vector<64x8xf32> to vector<64x8xbf16>
    %cst_12 = arith.constant dense<0.000000e+00> : vector<64x64xf32>
    %15 = tpu.matmul %14, %6, %cst_12 {dimension_numbers = #tpu.dot_dimension_numbers<[1], [0], [0], [1], [0, 0, 1, 1], [], []>} : vector<64x8xbf16>, vector<8x64xbf16>, vector<64x64xf32> -> vector<64x64xf32>
    %16 = vector.broadcast %7 : vector<1x64xf32> to vector<64x64xf32>
    %17 = arith.addf %15, %16 : vector<64x64xf32>
    %cst_13 = arith.constant 0.000000e+00 : f32
    %18 = vector.broadcast %cst_13 : f32 to vector<64x64xf32>
    %19 = arith.maximumf %17, %18 : vector<64x64xf32>
    %20 = arith.truncf %19 : vector<64x64xf32> to vector<64x64xbf16>
    %cst_14 = arith.constant dense<0.000000e+00> : vector<64x64xf32>
    %21 = tpu.matmul %20, %9, %cst_14 {dimension_numbers = #tpu.dot_dimension_numbers<[1], [0], [0], [1], [0, 0, 1, 1], [], []>} : vector<64x64xbf16>, vector<64x64xbf16>, vector<64x64xf32> -> vector<64x64xf32>
    %22 = vector.broadcast %10 : vector<1x64xf32> to vector<64x64xf32>
    %23 = arith.addf %21, %22 : vector<64x64xf32>
    %cst_15 = arith.constant 0.000000e+00 : f32
    %24 = vector.broadcast %cst_15 : f32 to vector<64x64xf32>
    %25 = arith.maximumf %23, %24 : vector<64x64xf32>
    %26 = arith.truncf %25 : vector<64x64xf32> to vector<64x64xbf16>
    %cst_16 = arith.constant dense<0.000000e+00> : vector<64x64xf32>
    %27 = tpu.matmul %26, %12, %cst_16 {dimension_numbers = #tpu.dot_dimension_numbers<[1], [0], [0], [1], [0, 0, 1, 1], [], []>} : vector<64x64xbf16>, vector<64x64xbf16>, vector<64x64xf32> -> vector<64x64xf32>
    %28 = vector.broadcast %13 : vector<1x64xf32> to vector<64x64xf32>
    %29 = arith.addf %27, %28 : vector<64x64xf32>
    %cst_17 = arith.constant 0.000000e+00 : f32
    %30 = vector.broadcast %cst_17 : f32 to vector<64x64xf32>
    %31 = arith.maximumf %29, %30 : vector<64x64xf32>
    %32 = vector.extract_strided_slice %0 {offsets = [0, 0, 0], sizes = [8, 1, 8], strides = [1, 1, 1]} : vector<8x8x8xf32> to vector<8x1x8xf32>
    %33 = vector.shape_cast %32 : vector<8x1x8xf32> to vector<8x8xf32>
    %c0_18 = arith.constant 0 : index
    %c0_19 = arith.constant 0 : index
    %c0_20 = arith.constant 0 : index
    %34 = vector.load %arg2[%c0_18, %c0_19, %c0_20] : memref<2x8x64xbf16, #tpu.memory_space<vmem>>, vector<1x8x64xbf16>
    %35 = vector.shape_cast %34 : vector<1x8x64xbf16> to vector<8x64xbf16>
    %c0_21 = arith.constant 0 : index
    %c0_22 = arith.constant 0 : index
    %36 = vector.load %arg5[%c0_21, %c0_22] : memref<9x64xf32, #tpu.memory_space<vmem>>, vector<1x64xf32>
    %c0_23 = arith.constant 0 : index
    %c0_24 = arith.constant 0 : index
    %c0_25 = arith.constant 0 : index
    %37 = vector.load %arg3[%c0_23, %c0_24, %c0_25] : memref<9x64x64xbf16, #tpu.memory_space<vmem>>, vector<1x64x64xbf16>
    %38 = vector.shape_cast %37 : vector<1x64x64xbf16> to vector<64x64xbf16>
    %c1_26 = arith.constant 1 : index
    %c0_27 = arith.constant 0 : index
    %39 = vector.load %arg5[%c1_26, %c0_27] : memref<9x64xf32, #tpu.memory_space<vmem>>, vector<1x64xf32>
    %c1_28 = arith.constant 1 : index
    %c0_29 = arith.constant 0 : index
    %c0_30 = arith.constant 0 : index
    %40 = vector.load %arg3[%c1_28, %c0_29, %c0_30] : memref<9x64x64xbf16, #tpu.memory_space<vmem>>, vector<1x64x64xbf16>
    %41 = vector.shape_cast %40 : vector<1x64x64xbf16> to vector<64x64xbf16>
    %c2_31 = arith.constant 2 : index
    %c0_32 = arith.constant 0 : index
    %42 = vector.load %arg5[%c2_31, %c0_32] : memref<9x64xf32, #tpu.memory_space<vmem>>, vector<1x64xf32>
    %43 = arith.truncf %33 : vector<8x8xf32> to vector<8x8xbf16>
    %cst_33 = arith.constant dense<0.000000e+00> : vector<8x64xf32>
    %44 = tpu.matmul %43, %35, %cst_33 {dimension_numbers = #tpu.dot_dimension_numbers<[1], [0], [0], [1], [0, 0, 1, 1], [], []>} : vector<8x8xbf16>, vector<8x64xbf16>, vector<8x64xf32> -> vector<8x64xf32>
    %45 = vector.broadcast %36 : vector<1x64xf32> to vector<8x64xf32>
    %46 = arith.addf %44, %45 : vector<8x64xf32>
    %cst_34 = arith.constant 0.000000e+00 : f32
    %47 = vector.broadcast %cst_34 : f32 to vector<8x64xf32>
    %48 = arith.maximumf %46, %47 : vector<8x64xf32>
    %49 = arith.truncf %48 : vector<8x64xf32> to vector<8x64xbf16>
    %cst_35 = arith.constant dense<0.000000e+00> : vector<8x64xf32>
    %50 = tpu.matmul %49, %38, %cst_35 {dimension_numbers = #tpu.dot_dimension_numbers<[1], [0], [0], [1], [0, 0, 1, 1], [], []>} : vector<8x64xbf16>, vector<64x64xbf16>, vector<8x64xf32> -> vector<8x64xf32>
    %51 = vector.broadcast %39 : vector<1x64xf32> to vector<8x64xf32>
    %52 = arith.addf %50, %51 : vector<8x64xf32>
    %cst_36 = arith.constant 0.000000e+00 : f32
    %53 = vector.broadcast %cst_36 : f32 to vector<8x64xf32>
    %54 = arith.maximumf %52, %53 : vector<8x64xf32>
    %55 = arith.truncf %54 : vector<8x64xf32> to vector<8x64xbf16>
    %cst_37 = arith.constant dense<0.000000e+00> : vector<8x64xf32>
    %56 = tpu.matmul %55, %41, %cst_37 {dimension_numbers = #tpu.dot_dimension_numbers<[1], [0], [0], [1], [0, 0, 1, 1], [], []>} : vector<8x64xbf16>, vector<64x64xbf16>, vector<8x64xf32> -> vector<8x64xf32>
    %57 = vector.broadcast %42 : vector<1x64xf32> to vector<8x64xf32>
    %58 = arith.addf %56, %57 : vector<8x64xf32>
    %cst_38 = arith.constant 0.000000e+00 : f32
    %59 = vector.broadcast %cst_38 : f32 to vector<8x64xf32>
    %60 = arith.maximumf %58, %59 : vector<8x64xf32>
    %61 = tpu.iota {dimensions = array<i32: 1>} : vector<8x8x1xi32>
    %c0_i32 = arith.constant 0 : i32
    %62 = vector.broadcast %c0_i32 : i32 to vector<8x8x1xi32>
    %63 = arith.cmpi eq, %61, %62 : vector<8x8x1xi32>
    %64 = vector.shape_cast %60 : vector<8x64xf32> to vector<8x1x64xf32>
    %65 = vector.shape_cast %31 : vector<64x64xf32> to vector<8x8x64xf32>
    %66 = vector.shape_cast %63 : vector<8x8x1xi1> to vector<8x8x1xi1>
    %67 = vector.broadcast %66 : vector<8x8x1xi1> to vector<8x8x64xi1>
    %68 = vector.shape_cast %64 : vector<8x1x64xf32> to vector<8x1x64xf32>
    %69 = vector.broadcast %68 : vector<8x1x64xf32> to vector<8x8x64xf32>
    %70 = arith.select %67, %69, %65 : vector<8x8x64xi1>, vector<8x8x64xf32>
    %71 = vector.shape_cast %70 : vector<8x8x64xf32> to vector<64x64xf32>
    %72 = arith.truncf %71 : vector<64x64xf32> to vector<64x64xbf16>
    %c0_39 = arith.constant 0 : index
    %c0_40 = arith.constant 0 : index
    %73 = vector.load %arg4[%c0_39, %c0_40] : memref<64x128xbf16, #tpu.memory_space<vmem>>, vector<64x128xbf16>
    %cst_41 = arith.constant dense<0.000000e+00> : vector<64x128xf32>
    %74 = tpu.matmul %72, %73, %cst_41 {dimension_numbers = #tpu.dot_dimension_numbers<[1], [0], [0], [1], [0, 0, 1, 1], [], []>} : vector<64x64xbf16>, vector<64x128xbf16>, vector<64x128xf32> -> vector<64x128xf32>
    %75 = vector.extract_strided_slice %74 {offsets = [0, 0], sizes = [64, 64], strides = [1, 1]} : vector<64x128xf32> to vector<64x64xf32>
    %76 = vector.shape_cast %75 : vector<64x64xf32> to vector<8x8x64xf32>
    %77 = vector.extract_strided_slice %74 {offsets = [0, 64], sizes = [64, 64], strides = [1, 1]} : vector<64x128xf32> to vector<64x64xf32>
    %78 = vector.shape_cast %77 : vector<64x64xf32> to vector<8x8x64xf32>
    %79 = arith.truncf %60 : vector<8x64xf32> to vector<8x64xbf16>
    %c4_42 = arith.constant 4 : index
    %c0_43 = arith.constant 0 : index
    %c0_44 = arith.constant 0 : index
    %80 = vector.load %arg3[%c4_42, %c0_43, %c0_44] : memref<9x64x64xbf16, #tpu.memory_space<vmem>>, vector<1x64x64xbf16>
    %81 = vector.shape_cast %80 : vector<1x64x64xbf16> to vector<64x64xbf16>
    %cst_45 = arith.constant dense<0.000000e+00> : vector<8x64xf32>
    %82 = tpu.matmul %79, %81, %cst_45 {dimension_numbers = #tpu.dot_dimension_numbers<[1], [0], [0], [1], [0, 0, 1, 1], [], []>} : vector<8x64xbf16>, vector<64x64xbf16>, vector<8x64xf32> -> vector<8x64xf32>
    %83 = vector.shape_cast %82 : vector<8x64xf32> to vector<8x1x64xf32>
    %84 = vector.broadcast %83 : vector<8x1x64xf32> to vector<8x8x64xf32>
    %85 = arith.mulf %76, %84 : vector<8x8x64xf32>
    %86 = vector.shape_cast %85 : vector<8x8x64xf32> to vector<64x64xf32>
    %87 = arith.truncf %86 : vector<64x64xf32> to vector<64x64xbf16>
    %c0_46 = arith.constant 0 : index
    %c0_47 = arith.constant 0 : index
    %88 = vector.load %arg8[%c0_46, %c0_47] : memref<64x64xbf16, #tpu.memory_space<vmem>>, vector<64x64xbf16>
    %cst_48 = arith.constant dense<0.000000e+00> : vector<64x64xf32>
    %89 = tpu.matmul %87, %88, %cst_48 {dimension_numbers = #tpu.dot_dimension_numbers<[1], [0], [0], [1], [0, 0, 1, 1], [], []>} : vector<64x64xbf16>, vector<64x64xbf16>, vector<64x64xf32> -> vector<64x64xf32>
    %90 = vector.shape_cast %89 : vector<64x64xf32> to vector<8x8x64xf32>
    %cst_49 = arith.constant -1.000000e+09 : f32
    %91 = vector.shape_cast %3 : vector<8x8x1xi1> to vector<8x8x1xi1>
    %92 = vector.broadcast %91 : vector<8x8x1xi1> to vector<8x8x64xi1>
    %93 = vector.broadcast %cst_49 : f32 to vector<8x8x64xf32>
    %94 = arith.select %92, %93, %90 : vector<8x8x64xi1>, vector<8x8x64xf32>
    %cst_50 = arith.constant dense<0xFF800000> : vector<8x64xf32>
    %95 = vector.multi_reduction <maximumf>, %94, %cst_50 [1] : vector<8x8x64xf32> to vector<8x64xf32>
    %96 = vector.shape_cast %95 : vector<8x64xf32> to vector<8x1x64xf32>
    %97 = vector.broadcast %96 : vector<8x1x64xf32> to vector<8x8x64xf32>
    %98 = arith.subf %94, %97 : vector<8x8x64xf32>
    %99 = math.exp %98 : vector<8x8x64xf32>
    %cst_51 = arith.constant dense<0.000000e+00> : vector<8x64xf32>
    %100 = vector.multi_reduction <add>, %99, %cst_51 [1] : vector<8x8x64xf32> to vector<8x64xf32>
    %101 = vector.shape_cast %100 : vector<8x64xf32> to vector<8x1x64xf32>
    %102 = tpu.reciprocal %101 {approx = true} : vector<8x1x64xf32> -> vector<8x1x64xf32>
    %103 = vector.broadcast %102 : vector<8x1x64xf32> to vector<8x8x64xf32>
    %104 = arith.mulf %99, %103 : vector<8x8x64xf32>
    %105 = arith.mulf %104, %78 : vector<8x8x64xf32>
    %cst_52 = arith.constant dense<0.000000e+00> : vector<8x64xf32>
    %106 = vector.multi_reduction <add>, %105, %cst_52 [1] : vector<8x8x64xf32> to vector<8x64xf32>
    %107 = arith.truncf %106 : vector<8x64xf32> to vector<8x64xbf16>
    %c5_53 = arith.constant 5 : index
    %c0_54 = arith.constant 0 : index
    %c0_55 = arith.constant 0 : index
    %108 = vector.load %arg3[%c5_53, %c0_54, %c0_55] : memref<9x64x64xbf16, #tpu.memory_space<vmem>>, vector<1x64x64xbf16>
    %109 = vector.shape_cast %108 : vector<1x64x64xbf16> to vector<64x64xbf16>
    %cst_56 = arith.constant dense<0.000000e+00> : vector<8x64xf32>
    %110 = tpu.matmul %107, %109, %cst_56 {dimension_numbers = #tpu.dot_dimension_numbers<[1], [0], [0], [1], [0, 0, 1, 1], [], []>} : vector<8x64xbf16>, vector<64x64xbf16>, vector<8x64xf32> -> vector<8x64xf32>
    %111 = arith.addf %110, %60 : vector<8x64xf32>
    %cst_57 = arith.constant 5.000000e-01 : f32
    %112 = vector.broadcast %cst_57 : f32 to vector<8x64xf32>
    %113 = arith.mulf %111, %112 : vector<8x64xf32>
    %c6 = arith.constant 6 : index
    %c0_58 = arith.constant 0 : index
    %c0_59 = arith.constant 0 : index
    %114 = vector.load %arg3[%c6, %c0_58, %c0_59] : memref<9x64x64xbf16, #tpu.memory_space<vmem>>, vector<1x64x64xbf16>
    %115 = vector.shape_cast %114 : vector<1x64x64xbf16> to vector<64x64xbf16>
    %c6_60 = arith.constant 6 : index
    %c0_61 = arith.constant 0 : index
    %116 = vector.load %arg5[%c6_60, %c0_61] : memref<9x64xf32, #tpu.memory_space<vmem>>, vector<1x64xf32>
    %c7 = arith.constant 7 : index
    %c0_62 = arith.constant 0 : index
    %c0_63 = arith.constant 0 : index
    %117 = vector.load %arg3[%c7, %c0_62, %c0_63] : memref<9x64x64xbf16, #tpu.memory_space<vmem>>, vector<1x64x64xbf16>
    %118 = vector.shape_cast %117 : vector<1x64x64xbf16> to vector<64x64xbf16>
    %c7_64 = arith.constant 7 : index
    %c0_65 = arith.constant 0 : index
    %119 = vector.load %arg5[%c7_64, %c0_65] : memref<9x64xf32, #tpu.memory_space<vmem>>, vector<1x64xf32>
    %c8 = arith.constant 8 : index
    %c0_66 = arith.constant 0 : index
    %c0_67 = arith.constant 0 : index
    %120 = vector.load %arg3[%c8, %c0_66, %c0_67] : memref<9x64x64xbf16, #tpu.memory_space<vmem>>, vector<1x64x64xbf16>
    %121 = vector.shape_cast %120 : vector<1x64x64xbf16> to vector<64x64xbf16>
    %c8_68 = arith.constant 8 : index
    %c0_69 = arith.constant 0 : index
    %122 = vector.load %arg5[%c8_68, %c0_69] : memref<9x64xf32, #tpu.memory_space<vmem>>, vector<1x64xf32>
    %123 = arith.truncf %113 : vector<8x64xf32> to vector<8x64xbf16>
    %cst_70 = arith.constant dense<0.000000e+00> : vector<8x64xf32>
    %124 = tpu.matmul %123, %115, %cst_70 {dimension_numbers = #tpu.dot_dimension_numbers<[1], [0], [0], [1], [0, 0, 1, 1], [], []>} : vector<8x64xbf16>, vector<64x64xbf16>, vector<8x64xf32> -> vector<8x64xf32>
    %125 = vector.broadcast %116 : vector<1x64xf32> to vector<8x64xf32>
    %126 = arith.addf %124, %125 : vector<8x64xf32>
    %cst_71 = arith.constant 0.000000e+00 : f32
    %127 = vector.broadcast %cst_71 : f32 to vector<8x64xf32>
    %128 = arith.maximumf %126, %127 : vector<8x64xf32>
    %129 = arith.truncf %128 : vector<8x64xf32> to vector<8x64xbf16>
    %cst_72 = arith.constant dense<0.000000e+00> : vector<8x64xf32>
    %130 = tpu.matmul %129, %118, %cst_72 {dimension_numbers = #tpu.dot_dimension_numbers<[1], [0], [0], [1], [0, 0, 1, 1], [], []>} : vector<8x64xbf16>, vector<64x64xbf16>, vector<8x64xf32> -> vector<8x64xf32>
    %131 = vector.broadcast %119 : vector<1x64xf32> to vector<8x64xf32>
    %132 = arith.addf %130, %131 : vector<8x64xf32>
    %cst_73 = arith.constant 0.000000e+00 : f32
    %133 = vector.broadcast %cst_73 : f32 to vector<8x64xf32>
    %134 = arith.maximumf %132, %133 : vector<8x64xf32>
    %135 = arith.truncf %134 : vector<8x64xf32> to vector<8x64xbf16>
    %cst_74 = arith.constant dense<0.000000e+00> : vector<8x64xf32>
    %136 = tpu.matmul %135, %121, %cst_74 {dimension_numbers = #tpu.dot_dimension_numbers<[1], [0], [0], [1], [0, 0, 1, 1], [], []>} : vector<8x64xbf16>, vector<64x64xbf16>, vector<8x64xf32> -> vector<8x64xf32>
    %137 = vector.broadcast %122 : vector<1x64xf32> to vector<8x64xf32>
    %138 = arith.addf %136, %137 : vector<8x64xf32>
    %cst_75 = arith.constant 0.000000e+00 : f32
    %139 = vector.broadcast %cst_75 : f32 to vector<8x64xf32>
    %140 = arith.maximumf %138, %139 : vector<8x64xf32>
    %141 = arith.truncf %140 : vector<8x64xf32> to vector<8x64xbf16>
    %c0_76 = arith.constant 0 : index
    %c0_77 = arith.constant 0 : index
    %142 = vector.load %arg6[%c0_76, %c0_77] : memref<64x128xbf16, #tpu.memory_space<vmem>>, vector<64x128xbf16>
    %cst_78 = arith.constant dense<0.000000e+00> : vector<8x128xf32>
    %143 = tpu.matmul %141, %142, %cst_78 {dimension_numbers = #tpu.dot_dimension_numbers<[1], [0], [0], [1], [0, 0, 1, 1], [], []>} : vector<8x64xbf16>, vector<64x128xbf16>, vector<8x128xf32> -> vector<8x128xf32>
    %c0_79 = arith.constant 0 : index
    %c0_80 = arith.constant 0 : index
    %144 = vector.load %arg7[%c0_79, %c0_80] : memref<1x128xf32, #tpu.memory_space<vmem>>, vector<1x128xf32>
    %145 = vector.broadcast %144 : vector<1x128xf32> to vector<8x128xf32>
    %146 = arith.addf %143, %145 : vector<8x128xf32>
    %147 = vector.extract_strided_slice %146 {offsets = [0, 0], sizes = [8, 5], strides = [1, 1]} : vector<8x128xf32> to vector<8x5xf32>
    %c0_81 = arith.constant 0 : index
    %c0_82 = arith.constant 0 : index
    %148 = vector.load %arg9[%c0_81, %c0_82] : memref<8x5xf32, #tpu.memory_space<vmem>>, vector<8x5xf32>
    tpu.vector_store %arg9[%c0_81, %c0_82], %147 {strides = array<i32>} : memref<8x5xf32, #tpu.memory_space<vmem>>, vector<8x5xf32>,
    return
  }
  func.func @transform_0(%arg0: i32) -> (i32, i32, i32) {
    %c0_i32 = arith.constant 0 : i32
    %c0_i32_0 = arith.constant 0 : i32
    %c0_i32_1 = arith.constant 0 : i32
    return %arg0, %c0_i32, %c0_i32_0 : i32, i32, i32
  }
  func.func @transform_1(%arg0: i32) -> (i32, i32, i32) {
    %c0_i32 = arith.constant 0 : i32
    %c0_i32_0 = arith.constant 0 : i32
    %c0_i32_1 = arith.constant 0 : i32
    %c0_i32_2 = arith.constant 0 : i32
    return %c0_i32, %c0_i32_0, %c0_i32_1 : i32, i32, i32
  }
  func.func @transform_2(%arg0: i32) -> (i32, i32, i32) {
    %c0_i32 = arith.constant 0 : i32
    %c0_i32_0 = arith.constant 0 : i32
    %c0_i32_1 = arith.constant 0 : i32
    %c0_i32_2 = arith.constant 0 : i32
    return %c0_i32, %c0_i32_0, %c0_i32_1 : i32, i32, i32
  }
  func.func @transform_3(%arg0: i32) -> (i32, i32) {
    %c0_i32 = arith.constant 0 : i32
    %c0_i32_0 = arith.constant 0 : i32
    %c0_i32_1 = arith.constant 0 : i32
    return %c0_i32, %c0_i32_0 : i32, i32
  }
  func.func @transform_4(%arg0: i32) -> (i32, i32) {
    %c0_i32 = arith.constant 0 : i32
    %c0_i32_0 = arith.constant 0 : i32
    %c0_i32_1 = arith.constant 0 : i32
    return %c0_i32, %c0_i32_0 : i32, i32
  }
  func.func @transform_5(%arg0: i32) -> (i32, i32) {
    %c0_i32 = arith.constant 0 : i32
    %c0_i32_0 = arith.constant 0 : i32
    %c0_i32_1 = arith.constant 0 : i32
    return %c0_i32, %c0_i32_0 : i32, i32
  }
  func.func @transform_6(%arg0: i32) -> (i32, i32) {
    %c0_i32 = arith.constant 0 : i32
    %c0_i32_0 = arith.constant 0 : i32
    %c0_i32_1 = arith.constant 0 : i32
    return %c0_i32, %c0_i32_0 : i32, i32
  }
  func.func @transform_7(%arg0: i32) -> (i32, i32) {
    %c0_i32 = arith.constant 0 : i32
    %c0_i32_0 = arith.constant 0 : i32
    %c0_i32_1 = arith.constant 0 : i32
    return %c0_i32, %c0_i32_0 : i32, i32
  }
  func.func @transform_8(%arg0: i32) -> (i32, i32) {
    %c0_i32 = arith.constant 0 : i32
    %c0_i32_0 = arith.constant 0 : i32
    return %arg0, %c0_i32 : i32, i32
  }
}

</mosaic_0001>

<llo_original>
// kernel: tpu_custom_call.1
$region0: #{tpu_custom_call.1}
  #allocation0 [shape = 'u32[]', space=smem, size = 0x4, offset = 0x4, fixed_abs, tag = 'smem constant byte address 0x4 - core index']
  #allocation1 [shape = 'u32[144,128]{1,0:T(1,128)}', space=vmem, size = 0x12000, scoped, tag = 'internal scratch']
  %s0 = inlined_call_operand.hbm [shape: f32[8,8,8], index: 0, kind: input, shape index: {}]
  %s1 = inlined_call_operand.hbm [shape: bf16[2,8,64], index: 1, kind: input, shape index: {}]
  %s2 = inlined_call_operand.hbm [shape: bf16[9,64,64], index: 2, kind: input, shape index: {}]
  %s3 = inlined_call_operand.hbm [shape: bf16[64,128], index: 3, kind: input, shape index: {}]
  %s4 = inlined_call_operand.hbm [shape: f32[9,64], index: 4, kind: input, shape index: {}]
  %s5 = inlined_call_operand.hbm [shape: bf16[64,128], index: 5, kind: input, shape index: {}]
  %s6 = inlined_call_operand.vmem [shape: f32[1,128], index: 6, kind: input, shape index: {}]
  %s7 = inlined_call_operand.hbm [shape: bf16[64,64], index: 7, kind: input, shape index: {}]
  %s8 = inlined_call_operand.hbm [shape: f32[8,5], index: 8, kind: output, shape index: {}]
  %s9 = sld [smem:[#allocation0]]
  $region70: #{tpu_custom_call.1} parent=0
    _
  %s11 = ssub.s32 1, %s9
  %s12 = scalar_select 0, %s11, %s9
  $region1: #{tpu_custom_call.1} parent=0
    #allocation2 [shape = 'u8[32768]{0}', space=vmem, size = 0x8000, scoped, tag = 'input window, operand 0, single buffered']
    #allocation3 [shape = 's32[1]{0}', space=sflag, size = 0x4, scoped, tag = 'scoped memory for tpu_custom_call.1']
    #allocation4 [shape = 's32[1]{0}', space=sflag, size = 0x4, scoped, tag = 'scoped memory for tpu_custom_call.1']
    #allocation5 [shape = 'u8[4096]{0}', space=vmem, size = 0x1000, scoped, tag = 'input window, operand 1, single buffered']
    #allocation6 [shape = 's32[1]{0}', space=sflag, size = 0x4, scoped, tag = 'scoped memory for tpu_custom_call.1']
    #allocation7 [shape = 'u8[147456]{0}', space=vmem, size = 0x24000, scoped, tag = 'input window, operand 2, single buffered']
    #allocation8 [shape = 'u8[16384]{0}', space=vmem, size = 0x4000, scoped, tag = 'input window, operand 3, single buffered']
    #allocation9 [shape = 's32[1]{0}', space=sflag, size = 0x4, scoped, tag = 'scoped memory for tpu_custom_call.1']
    #allocation10 [shape = 'u8[8192]{0}', space=vmem, size = 0x2000, scoped, tag = 'input window, operand 4, single buffered']
    #allocation11 [shape = 'u8[16384]{0}', space=vmem, size = 0x4000, scoped, tag = 'input window, operand 5, single buffered']
    #allocation12 [shape = 's32[1]{0}', space=sflag, size = 0x4, scoped, tag = 'scoped memory for tpu_custom_call.1']
    #allocation13 [shape = 'u8[16384]{0}', space=vmem, size = 0x4000, scoped, tag = 'input window, operand 7, single buffered']
    #allocation14 [shape = 'u8[4096]{0}', space=vmem, size = 0x1000, scoped, tag = 'output window, operand 0, single buffered']
    %13 = vsyncpa [#allocation3], 0
    %14 = vsyncpa [#allocation6], 0
    %15 = vsyncpa [#allocation9], 0
    %16 = vsyncpa [#allocation12], 0
    %17 = vsyncpa [#allocation4], 0
    // Predicated region
    $region2: #{tpu_custom_call.1} parent=1 // pred_check
      _
    $region3: #{tpu_custom_call.1} parent=1 // pred_check_branch
      %19 = sbr.rel (0) target = $region5
    $region4: #{tpu_custom_call.1} parent=1 // pred_region
      %s21 = ssub.s32 1024, 1024
      %22 = vsyncadd [#allocation3], %s21
      %s23 = sshll.u32 [#allocation2], 4
      %s24 = int_to_ptr.vmem [resolvable:$true] %s23
      %29 = dma.hbm_to_vmem [thread:$0]  %s0, 1024, %s24, [#allocation3], 128, 128, 8
    $region5: #{tpu_custom_call.1} parent=1 // pred_fallthru
      _
    // Predicated region
    $region6: #{tpu_custom_call.1} parent=1 // pred_check
      _
    $region7: #{tpu_custom_call.1} parent=1 // pred_check_branch
      %31 = sbr.rel (0) target = $region9
    $region8: #{tpu_custom_call.1} parent=1 // pred_region
      %s33 = ssub.s32 128, 128
      %34 = vsyncadd [#allocation6], %s33
      %s35 = sshll.u32 [#allocation5], 4
      %s36 = int_to_ptr.vmem [resolvable:$true] %s35
      %41 = dma.hbm_to_vmem [thread:$0]  %s1, 128, %s36, [#allocation6], 64, 64, 4
    $region9: #{tpu_custom_call.1} parent=1 // pred_fallthru
      _
    // Predicated region
    $region10: #{tpu_custom_call.1} parent=1 // pred_check
      _
    $region11: #{tpu_custom_call.1} parent=1 // pred_check_branch
      %43 = sbr.rel (0) target = $region13
    $region12: #{tpu_custom_call.1} parent=1 // pred_region
      %s45 = ssub.s32 4608, 4608
      %46 = vsyncadd [#allocation6], %s45
      %s47 = sshll.u32 [#allocation7], 4
      %s48 = int_to_ptr.vmem [resolvable:$true] %s47
      %53 = dma.hbm_to_vmem [thread:$0]  %s2, 4608, %s48, [#allocation6], 64, 64, 4
    $region13: #{tpu_custom_call.1} parent=1 // pred_fallthru
      _
    // Predicated region
    $region14: #{tpu_custom_call.1} parent=1 // pred_check
      _
    $region15: #{tpu_custom_call.1} parent=1 // pred_check_branch
      %55 = sbr.rel (0) target = $region17
    $region16: #{tpu_custom_call.1} parent=1 // pred_region
      %s57 = ssub.s32 512, 512
      %58 = vsyncadd [#allocation9], %s57
      %s59 = sshll.u32 [#allocation8], 4
      %s60 = int_to_ptr.vmem [resolvable:$true] %s59
      %65 = dma.hbm_to_vmem [thread:$0]  %s3, 512, %s60, [#allocation9], 64, 64, 4
    $region17: #{tpu_custom_call.1} parent=1 // pred_fallthru
      _
    // Predicated region
    $region18: #{tpu_custom_call.1} parent=1 // pred_check
      _
    $region19: #{tpu_custom_call.1} parent=1 // pred_check_branch
      %67 = sbr.rel (0) target = $region21
    $region20: #{tpu_custom_call.1} parent=1 // pred_region
      %s69 = ssub.s32 256, 256
      %70 = vsyncadd [#allocation9], %s69
      %s71 = sshll.u32 [#allocation10], 4
      %s72 = int_to_ptr.vmem [resolvable:$true] %s71
      %77 = dma.hbm_to_vmem [thread:$0]  %s4, 256, %s72, [#allocation9], 128, 128, 8
    $region21: #{tpu_custom_call.1} parent=1 // pred_fallthru
      _
    // Predicated region
    $region22: #{tpu_custom_call.1} parent=1 // pred_check
      _
    $region23: #{tpu_custom_call.1} parent=1 // pred_check_branch
      %79 = sbr.rel (0) target = $region25
    $region24: #{tpu_custom_call.1} parent=1 // pred_region
      %s81 = ssub.s32 512, 512
      %82 = vsyncadd [#allocation12], %s81
      %s83 = sshll.u32 [#allocation11], 4
      %s84 = int_to_ptr.vmem [resolvable:$true] %s83
      %89 = dma.hbm_to_vmem [thread:$0]  %s5, 512, %s84, [#allocation12], 64, 64, 4
    $region25: #{tpu_custom_call.1} parent=1 // pred_fallthru
      _
    // Predicated region
    $region26: #{tpu_custom_call.1} parent=1 // pred_check
      _
    $region27: #{tpu_custom_call.1} parent=1 // pred_check_branch
      %91 = sbr.rel (0) target = $region29
    $region28: #{tpu_custom_call.1} parent=1 // pred_region
      _
    $region29: #{tpu_custom_call.1} parent=1 // pred_fallthru
      _
    // Predicated region
    $region30: #{tpu_custom_call.1} parent=1 // pred_check
      _
    $region31: #{tpu_custom_call.1} parent=1 // pred_check_branch
      %93 = sbr.rel (0) target = $region33
    $region32: #{tpu_custom_call.1} parent=1 // pred_region
      %s95 = ssub.s32 512, 512
      %96 = vsyncadd [#allocation12], %s95
      %s97 = sshll.u32 [#allocation13], 4
      %s98 = int_to_ptr.vmem [resolvable:$true] %s97
      %103 = dma.hbm_to_vmem [thread:$0]  %s7, 512, %s98, [#allocation12], 64, 64, 4
    $region33: #{tpu_custom_call.1} parent=1 // pred_fallthru
      _
    // Predicated region
    $region34: #{tpu_custom_call.1} parent=1 // pred_check
      _
    $region35: #{tpu_custom_call.1} parent=1 // pred_check_branch
      %105 = sbr.rel (0) target = $region37
    $region36: #{tpu_custom_call.1} parent=1 // pred_region
      %106 = dma.done [#allocation3], 1024
    $region37: #{tpu_custom_call.1} parent=1 // pred_fallthru
      _
    // Predicated region
    $region38: #{tpu_custom_call.1} parent=1 // pred_check
      _
    $region39: #{tpu_custom_call.1} parent=1 // pred_check_branch
      %108 = sbr.rel (0) target = $region41
    $region40: #{tpu_custom_call.1} parent=1 // pred_region
      %109 = dma.done [#allocation6], 128
    $region41: #{tpu_custom_call.1} parent=1 // pred_fallthru
      _
    // Predicated region
    $region42: #{tpu_custom_call.1} parent=1 // pred_check
      _
    $region43: #{tpu_custom_call.1} parent=1 // pred_check_branch
      %111 = sbr.rel (0) target = $region45
    $region44: #{tpu_custom_call.1} parent=1 // pred_region
      %112 = dma.done [#allocation6], 4608
    $region45: #{tpu_custom_call.1} parent=1 // pred_fallthru
      _
    // Predicated region
    $region46: #{tpu_custom_call.1} parent=1 // pred_check
      _
    $region47: #{tpu_custom_call.1} parent=1 // pred_check_branch
      %114 = sbr.rel (0) target = $region49
    $region48: #{tpu_custom_call.1} parent=1 // pred_region
      %115 = dma.done [#allocation9], 512
    $region49: #{tpu_custom_call.1} parent=1 // pred_fallthru
      _
    // Predicated region
    $region50: #{tpu_custom_call.1} parent=1 // pred_check
      _
    $region51: #{tpu_custom_call.1} parent=1 // pred_check_branch
      %117 = sbr.rel (0) target = $region53
    $region52: #{tpu_custom_call.1} parent=1 // pred_region
      %118 = dma.done [#allocation9], 256
    $region53: #{tpu_custom_call.1} parent=1 // pred_fallthru
      _
    // Predicated region
    $region54: #{tpu_custom_call.1} parent=1 // pred_check
      _
    $region55: #{tpu_custom_call.1} parent=1 // pred_check_branch
      %120 = sbr.rel (0) target = $region57
    $region56: #{tpu_custom_call.1} parent=1 // pred_region
      %121 = dma.done [#allocation12], 512
    $region57: #{tpu_custom_call.1} parent=1 // pred_fallthru
      _
    // Predicated region
    $region58: #{tpu_custom_call.1} parent=1 // pred_check
      _
    $region59: #{tpu_custom_call.1} parent=1 // pred_check_branch
      %123 = sbr.rel (0) target = $region61
    $region60: #{tpu_custom_call.1} parent=1 // pred_region
      %124 = dma.done [#allocation12], 512
    $region61: #{tpu_custom_call.1} parent=1 // pred_fallthru
      _
    %v126 = vld [vmem:[#allocation2] sm:$0xff]
    %v127 = vld [vmem:[#allocation2 + $0x8] sm:$0xff]
    %v128 = vld [vmem:[#allocation2 + $0x10] sm:$0xff]
    %v129 = vld [vmem:[#allocation2 + $0x18] sm:$0xff]
    %v130 = vld [vmem:[#allocation2 + $0x20] sm:$0xff]
    %v131 = vld [vmem:[#allocation2 + $0x28] sm:$0xff]
    %v132 = vld [vmem:[#allocation2 + $0x30] sm:$0xff]
    %v133 = vld [vmem:[#allocation2 + $0x38] sm:$0xff]
    %vm134 = vcmp.lt.f32.partialorder %v126, 0.5
    %vm135 = vcmp.lt.f32.partialorder %v127, 0.5
    %vm136 = vcmp.lt.f32.partialorder %v128, 0.5
    %vm137 = vcmp.lt.f32.partialorder %v129, 0.5
    %vm138 = vcmp.lt.f32.partialorder %v130, 0.5
    %vm139 = vcmp.lt.f32.partialorder %v131, 0.5
    %vm140 = vcmp.lt.f32.partialorder %v132, 0.5
    %vm141 = vcmp.lt.f32.partialorder %v133, 0.5
    %s142 = scalar_lea.vmem [#allocation5], 4
    %v143 = vld [vmem:[%s142] sm:$0xf]
    %v144 = vld [vmem:[#allocation10 + $0x3] sm:$0x1]
    %s145 = scalar_lea.vmem [#allocation7], 64
    %v146 = vld [vmem:[%s145] sm:$0xf]
    %v147 = vld [vmem:[%s145 + $0x4] sm:$0xf]
    %v148 = vld [vmem:[%s145 + $0x8] sm:$0xf]
    %v149 = vld [vmem:[%s145 + $0xc] sm:$0xf]
    %v150 = vld [vmem:[%s145 + $0x10] sm:$0xf]
    %v151 = vld [vmem:[%s145 + $0x14] sm:$0xf]
    %v152 = vld [vmem:[%s145 + $0x18] sm:$0xf]
    %v153 = vld [vmem:[%s145 + $0x1c] sm:$0xf]
    %v154 = vld [vmem:[#allocation10 + $0x4] sm:$0x1]
    %s155 = scalar_lea.vmem [#allocation7], 96
    %v156 = vld [vmem:[%s155] sm:$0xf]
    %v157 = vld [vmem:[%s155 + $0x4] sm:$0xf]
    %v158 = vld [vmem:[%s155 + $0x8] sm:$0xf]
    %v159 = vld [vmem:[%s155 + $0xc] sm:$0xf]
    %v160 = vld [vmem:[%s155 + $0x10] sm:$0xf]
    %v161 = vld [vmem:[%s155 + $0x14] sm:$0xf]
    %v162 = vld [vmem:[%s155 + $0x18] sm:$0xf]
    %v163 = vld [vmem:[%s155 + $0x1c] sm:$0xf]
    %v164 = vld [vmem:[#allocation10 + $0x5] sm:$0x1]
    %v165 = vpack.c.bf16 %v127, %v126
    %v166 = vpack.c.bf16 %v129, %v128
    %v167 = vpack.c.bf16 %v131, %v130
    %v168 = vpack.c.bf16 %v133, %v132
    %v169 = vlaneseq
    %v170 = vshrl.u32 %v169, 7
    %v171 = vsub.s32 0, %v170
    %v172 = vrot.slane %v144, %v171
    %vm173 = vcmask 64512
    %v175 = vsel %vm173, %v165, 0
    %v178 = vsel %vm173, %v166, 0
    %v181 = vsel %vm173, %v167, 0
    %v184 = vsel %vm173, %v168, 0
    %vm186 = vcmask 1043456
    %v188 = vsel %vm186, %v143, 0
    %190 = vmatprep.subr.bf16.mxu0 0
    %191 = vmatpush1.bf16.msra.mxu0 %v188
    %192 = vmatprep.subr.bf16.mxu0 0
    %193 = vmatpush1.bf16.msra.mxu0 0
    %194 = vmatprep.subr.bf16.mxu0 0
    %195 = vmatpush1.bf16.msra.mxu0 0
    %196 = vmatprep.subr.bf16.mxu0 0
    %197 = vmatpush1.bf16.msra.mxu0 0
    %198 = vmatprep.subr.bf16.mxu0 0
    %199 = vmatpush1.bf16.msra.mxu0 0
    %200 = vmatprep.subr.bf16.mxu0 0
    %201 = vmatpush1.bf16.msra.mxu0 0
    %202 = vmatprep.subr.bf16.mxu0 0
    %203 = vmatpush1.bf16.msra.mxu0 0
    %204 = vmatprep.subr.bf16.mxu0 0
    %205 = vmatpush1.bf16.msra.mxu0 0
    %206 = vmatprep.subr.bf16.mxu0 0
    %207 = vmatpush1.bf16.msra.mxu0 0
    %208 = vmatprep.subr.bf16.mxu0 0
    %209 = vmatpush1.bf16.msra.mxu0 0
    %210 = vmatprep.subr.bf16.mxu0 0
    %211 = vmatpush1.bf16.msra.mxu0 0
    %212 = vmatprep.subr.bf16.mxu0 0
    %213 = vmatpush1.bf16.msra.mxu0 0
    %214 = vmatprep.subr.bf16.mxu0 0
    %215 = vmatpush1.bf16.msra.mxu0 0
    %216 = vmatprep.subr.bf16.mxu0 0
    %217 = vmatpush1.bf16.msra.mxu0 0
    %218 = vmatprep.subr.bf16.mxu0 0
    %219 = vmatpush1.bf16.msra.mxu0 0
    %220 = vmatprep.subr.bf16.mxu0 0
    %221 = vmatpush1.bf16.msra.mxu0 0
    %222 = vmatprep.mubr.bf16.mxu0 0
    %223 = vmatmul.mubr.bf16.gmra.mrb[0].mxu0 %v175
    %v224 = vpop.f32.mrb[0].mxu0
    %v225 = vadd.f32 %v172, %v224
    %v226 = vpop.f32.mrb[0].mxu0
    %v227 = vpop.f32.mrb[0].mxu0
    %v228 = vadd.f32 %v172, %v227
    %v229 = vpop.f32.mrb[0].mxu0
    %230 = vmatprep.mubr.bf16.mxu0 0
    %231 = vmatmul.mubr.bf16.gmra.mrb[0].mxu0 %v178
    %v232 = vpop.f32.mrb[0].mxu0
    %v233 = vadd.f32 %v172, %v232
    %v234 = vpop.f32.mrb[0].mxu0
    %v235 = vpop.f32.mrb[0].mxu0
    %v236 = vadd.f32 %v172, %v235
    %v237 = vpop.f32.mrb[0].mxu0
    %238 = vmatprep.mubr.bf16.mxu0 0
    %239 = vmatmul.mubr.bf16.gmra.mrb[0].mxu0 %v181
    %v240 = vpop.f32.mrb[0].mxu0
    %v241 = vadd.f32 %v172, %v240
    %v242 = vpop.f32.mrb[0].mxu0
    %v243 = vpop.f32.mrb[0].mxu0
    %v244 = vadd.f32 %v172, %v243
    %v245 = vpop.f32.mrb[0].mxu0
    %246 = vmatprep.mubr.bf16.mxu0 0
    %247 = vmatmul.mubr.bf16.gmra.mrb[0].mxu0 %v184
    %v248 = vpop.f32.mrb[0].mxu0
    %v249 = vadd.f32 %v172, %v248
    %v250 = vpop.f32.mrb[0].mxu0
    %v251 = vpop.f32.mrb[0].mxu0
    %v252 = vadd.f32 %v172, %v251
    %v253 = vpop.f32.mrb[0].mxu0
    %254 = vdwg.mxu0
    %v255 = vmax.f32 %v225, 0.0
    %v256 = vmax.f32 %v228, 0.0
    %v257 = vmax.f32 %v233, 0.0
    %v258 = vmax.f32 %v236, 0.0
    %v259 = vmax.f32 %v241, 0.0
    %v260 = vmax.f32 %v244, 0.0
    %v261 = vmax.f32 %v249, 0.0
    %v262 = vmax.f32 %v252, 0.0
    %v263 = vpack.c.bf16 %v256, %v255
    %v264 = vpack.c.bf16 %v258, %v257
    %v265 = vpack.c.bf16 %v260, %v259
    %v266 = vpack.c.bf16 %v262, %v261
    %v267 = vlaneseq
    %v268 = vshrl.u32 %v267, 7
    %v269 = vsub.s32 0, %v268
    %v270 = vrot.slane %v154, %v269
    %v279 = vunpack.c.l.b16 %v146
    %v280 = vunpack.c.l.b16 %v147
    %v281 = vunpack.c.l.b16 %v148
    %v282 = vunpack.c.l.b16 %v149
    %v283 = vunpack.c.l.b16 %v150
    %v284 = vunpack.c.l.b16 %v151
    %v285 = vunpack.c.l.b16 %v152
    %v286 = vunpack.c.l.b16 %v153
    %v287 = vpack.c.b16 %v280, %v279
    %v288 = vpack.c.b16 %v282, %v281
    %v289 = vpack.c.b16 %v284, %v283
    %v290 = vpack.c.b16 %v286, %v285
    %vm295 = vcmask 523264
    %v297 = vsel %vm295, %v263, 0
    %v300 = vsel %vm295, %v264, 0
    %v303 = vsel %vm295, %v265, 0
    %v306 = vsel %vm295, %v266, 0
    %308 = vmatprep.subr.bf16.mxu0 0
    %309 = vmatpush1.bf16.msra.mxu0 %v287
    %310 = vmatprep.subr.bf16.mxu0 0
    %311 = vmatpush1.bf16.msra.mxu0 %v288
    %312 = vmatprep.subr.bf16.mxu0 0
    %313 = vmatpush1.bf16.msra.mxu0 %v289
    %314 = vmatprep.subr.bf16.mxu0 0
    %315 = vmatpush1.bf16.msra.mxu0 %v290
    %316 = vmatprep.subr.bf16.mxu0 0
    %317 = vmatpush1.bf16.msra.mxu0 0
    %318 = vmatprep.subr.bf16.mxu0 0
    %319 = vmatpush1.bf16.msra.mxu0 0
    %320 = vmatprep.subr.bf16.mxu0 0
    %321 = vmatpush1.bf16.msra.mxu0 0
    %322 = vmatprep.subr.bf16.mxu0 0
    %323 = vmatpush1.bf16.msra.mxu0 0
    %324 = vmatprep.subr.bf16.mxu0 0
    %325 = vmatpush1.bf16.msra.mxu0 0
    %326 = vmatprep.subr.bf16.mxu0 0
    %327 = vmatpush1.bf16.msra.mxu0 0
    %328 = vmatprep.subr.bf16.mxu0 0
    %329 = vmatpush1.bf16.msra.mxu0 0
    %330 = vmatprep.subr.bf16.mxu0 0
    %331 = vmatpush1.bf16.msra.mxu0 0
    %332 = vmatprep.subr.bf16.mxu0 0
    %333 = vmatpush1.bf16.msra.mxu0 0
    %334 = vmatprep.subr.bf16.mxu0 0
    %335 = vmatpush1.bf16.msra.mxu0 0
    %336 = vmatprep.subr.bf16.mxu0 0
    %337 = vmatpush1.bf16.msra.mxu0 0
    %338 = vmatprep.subr.bf16.mxu0 0
    %339 = vmatpush1.bf16.msra.mxu0 0
    %340 = vmatprep.mubr.bf16.mxu0 0
    %341 = vmatmul.mubr.bf16.gmra.mrb[0].mxu0 %v297
    %v342 = vpop.f32.mrb[0].mxu0
    %v343 = vadd.f32 %v270, %v342
    %v344 = vpop.f32.mrb[0].mxu0
    %v345 = vpop.f32.mrb[0].mxu0
    %v346 = vadd.f32 %v270, %v345
    %v347 = vpop.f32.mrb[0].mxu0
    %348 = vmatprep.mubr.bf16.mxu0 0
    %349 = vmatmul.mubr.bf16.gmra.mrb[0].mxu0 %v300
    %v350 = vpop.f32.mrb[0].mxu0
    %v351 = vadd.f32 %v270, %v350
    %v352 = vpop.f32.mrb[0].mxu0
    %v353 = vpop.f32.mrb[0].mxu0
    %v354 = vadd.f32 %v270, %v353
    %v355 = vpop.f32.mrb[0].mxu0
    %356 = vmatprep.mubr.bf16.mxu0 0
    %357 = vmatmul.mubr.bf16.gmra.mrb[0].mxu0 %v303
    %v358 = vpop.f32.mrb[0].mxu0
    %v359 = vadd.f32 %v270, %v358
    %v360 = vpop.f32.mrb[0].mxu0
    %v361 = vpop.f32.mrb[0].mxu0
    %v362 = vadd.f32 %v270, %v361
    %v363 = vpop.f32.mrb[0].mxu0
    %364 = vmatprep.mubr.bf16.mxu0 0
    %365 = vmatmul.mubr.bf16.gmra.mrb[0].mxu0 %v306
    %v366 = vpop.f32.mrb[0].mxu0
    %v367 = vadd.f32 %v270, %v366
    %v368 = vpop.f32.mrb[0].mxu0
    %v369 = vpop.f32.mrb[0].mxu0
    %v370 = vadd.f32 %v270, %v369
    %v371 = vpop.f32.mrb[0].mxu0
    %372 = vdwg.mxu0
    %v373 = vmax.f32 %v343, 0.0
    %v374 = vmax.f32 %v346, 0.0
    %v375 = vmax.f32 %v351, 0.0
    %v376 = vmax.f32 %v354, 0.0
    %v377 = vmax.f32 %v359, 0.0
    %v378 = vmax.f32 %v362, 0.0
    %v379 = vmax.f32 %v367, 0.0
    %v380 = vmax.f32 %v370, 0.0
    %v381 = vpack.c.bf16 %v374, %v373
    %v382 = vpack.c.bf16 %v376, %v375
    %v383 = vpack.c.bf16 %v378, %v377
    %v384 = vpack.c.bf16 %v380, %v379
    %v385 = vlaneseq
    %v386 = vshrl.u32 %v385, 7
    %v387 = vsub.s32 0, %v386
    %v388 = vrot.slane %v164, %v387
    %v397 = vunpack.c.l.b16 %v156
    %v398 = vunpack.c.l.b16 %v157
    %v399 = vunpack.c.l.b16 %v158
    %v400 = vunpack.c.l.b16 %v159
    %v401 = vunpack.c.l.b16 %v160
    %v402 = vunpack.c.l.b16 %v161
    %v403 = vunpack.c.l.b16 %v162
    %v404 = vunpack.c.l.b16 %v163
    %v405 = vpack.c.b16 %v398, %v397
    %v406 = vpack.c.b16 %v400, %v399
    %v407 = vpack.c.b16 %v402, %v401
    %v408 = vpack.c.b16 %v404, %v403
    %v414 = vsel %vm295, %v381, 0
    %v417 = vsel %vm295, %v382, 0
    %v420 = vsel %vm295, %v383, 0
    %v423 = vsel %vm295, %v384, 0
    %425 = vmatprep.subr.bf16.mxu0 0
    %426 = vmatpush1.bf16.msra.mxu0 %v405
    %427 = vmatprep.subr.bf16.mxu0 0
    %428 = vmatpush1.bf16.msra.mxu0 %v406
    %429 = vmatprep.subr.bf16.mxu0 0
    %430 = vmatpush1.bf16.msra.mxu0 %v407
    %431 = vmatprep.subr.bf16.mxu0 0
    %432 = vmatpush1.bf16.msra.mxu0 %v408
    %433 = vmatprep.subr.bf16.mxu0 0
    %434 = vmatpush1.bf16.msra.mxu0 0
    %435 = vmatprep.subr.bf16.mxu0 0
    %436 = vmatpush1.bf16.msra.mxu0 0
    %437 = vmatprep.subr.bf16.mxu0 0
    %438 = vmatpush1.bf16.msra.mxu0 0
    %439 = vmatprep.subr.bf16.mxu0 0
    %440 = vmatpush1.bf16.msra.mxu0 0
    %441 = vmatprep.subr.bf16.mxu0 0
    %442 = vmatpush1.bf16.msra.mxu0 0
    %443 = vmatprep.subr.bf16.mxu0 0
    %444 = vmatpush1.bf16.msra.mxu0 0
    %445 = vmatprep.subr.bf16.mxu0 0
    %446 = vmatpush1.bf16.msra.mxu0 0
    %447 = vmatprep.subr.bf16.mxu0 0
    %448 = vmatpush1.bf16.msra.mxu0 0
    %449 = vmatprep.subr.bf16.mxu0 0
    %450 = vmatpush1.bf16.msra.mxu0 0
    %451 = vmatprep.subr.bf16.mxu0 0
    %452 = vmatpush1.bf16.msra.mxu0 0
    %453 = vmatprep.subr.bf16.mxu0 0
    %454 = vmatpush1.bf16.msra.mxu0 0
    %455 = vmatprep.subr.bf16.mxu0 0
    %456 = vmatpush1.bf16.msra.mxu0 0
    %457 = vmatprep.mubr.bf16.mxu0 0
    %458 = vmatmul.mubr.bf16.gmra.mrb[0].mxu0 %v414
    %v459 = vpop.f32.mrb[0].mxu0
    %v460 = vadd.f32 %v388, %v459
    %v461 = vpop.f32.mrb[0].mxu0
    %v462 = vpop.f32.mrb[0].mxu0
    %v463 = vadd.f32 %v388, %v462
    %v464 = vpop.f32.mrb[0].mxu0
    %465 = vmatprep.mubr.bf16.mxu0 0
    %466 = vmatmul.mubr.bf16.gmra.mrb[0].mxu0 %v417
    %v467 = vpop.f32.mrb[0].mxu0
    %v468 = vadd.f32 %v388, %v467
    %v469 = vpop.f32.mrb[0].mxu0
    %v470 = vpop.f32.mrb[0].mxu0
    %v471 = vadd.f32 %v388, %v470
    %v472 = vpop.f32.mrb[0].mxu0
    %473 = vmatprep.mubr.bf16.mxu0 0
    %474 = vmatmul.mubr.bf16.gmra.mrb[0].mxu0 %v420
    %v475 = vpop.f32.mrb[0].mxu0
    %v476 = vadd.f32 %v388, %v475
    %v477 = vpop.f32.mrb[0].mxu0
    %v478 = vpop.f32.mrb[0].mxu0
    %v479 = vadd.f32 %v388, %v478
    %v480 = vpop.f32.mrb[0].mxu0
    %481 = vmatprep.mubr.bf16.mxu0 0
    %482 = vmatmul.mubr.bf16.gmra.mrb[0].mxu0 %v423
    %v483 = vpop.f32.mrb[0].mxu0
    %v484 = vadd.f32 %v388, %v483
    %v485 = vpop.f32.mrb[0].mxu0
    %v486 = vpop.f32.mrb[0].mxu0
    %v487 = vadd.f32 %v388, %v486
    %v488 = vpop.f32.mrb[0].mxu0
    %489 = vdwg.mxu0
    %v490 = vmax.f32 %v460, 0.0
    %v491 = vmax.f32 %v463, 0.0
    %v492 = vmax.f32 %v468, 0.0
    %v493 = vmax.f32 %v471, 0.0
    %v494 = vmax.f32 %v476, 0.0
    %v495 = vmax.f32 %v479, 0.0
    %v496 = vmax.f32 %v484, 0.0
    %v497 = vmax.f32 %v487, 0.0
    %v498 = vld [vmem:[#allocation5] sm:$0xf]
    %v499 = vld [vmem:[#allocation10] sm:$0x1]
    %v500 = vld [vmem:[#allocation7] sm:$0xf]
    %v501 = vld [vmem:[#allocation7 + $0x4] sm:$0xf]
    %v502 = vld [vmem:[#allocation7 + $0x8] sm:$0xf]
    %v503 = vld [vmem:[#allocation7 + $0xc] sm:$0xf]
    %v504 = vld [vmem:[#allocation7 + $0x10] sm:$0xf]
    %v505 = vld [vmem:[#allocation7 + $0x14] sm:$0xf]
    %v506 = vld [vmem:[#allocation7 + $0x18] sm:$0xf]
    %v507 = vld [vmem:[#allocation7 + $0x1c] sm:$0xf]
    %v508 = vld [vmem:[#allocation10 + $0x1] sm:$0x1]
    %s509 = scalar_lea.vmem [#allocation7], 32
    %v510 = vld [vmem:[%s509] sm:$0xf]
    %v511 = vld [vmem:[%s509 + $0x4] sm:$0xf]
    %v512 = vld [vmem:[%s509 + $0x8] sm:$0xf]
    %v513 = vld [vmem:[%s509 + $0xc] sm:$0xf]
    %v514 = vld [vmem:[%s509 + $0x10] sm:$0xf]
    %v515 = vld [vmem:[%s509 + $0x14] sm:$0xf]
    %v516 = vld [vmem:[%s509 + $0x18] sm:$0xf]
    %v517 = vld [vmem:[%s509 + $0x1c] sm:$0xf]
    %v518 = vld [vmem:[#allocation10 + $0x2] sm:$0x1]
    %v519 = vpack.c.bf16 %v126, %v126
    %v520 = vpack.c.bf16 %v127, %v127
    %v521 = vpack.c.bf16 %v128, %v128
    %v522 = vpack.c.bf16 %v129, %v129
    %v523 = vpack.c.bf16 %v130, %v130
    %v524 = vpack.c.bf16 %v131, %v131
    %v525 = vpack.c.bf16 %v132, %v132
    %v526 = vpack.c.bf16 %v133, %v133
    %v527 = vlaneseq
    %v528 = vshrl.u32 %v527, 7
    %v529 = vsub.s32 0, %v528
    %v530 = vrot.slane %v499, %v529
    %v539 = vunpack.c.l.b16 %v519
    %v540 = vunpack.c.l.b16 %v520
    %v541 = vunpack.c.l.b16 %v521
    %v542 = vunpack.c.l.b16 %v522
    %v543 = vunpack.c.l.b16 %v523
    %v544 = vunpack.c.l.b16 %v524
    %v545 = vunpack.c.l.b16 %v525
    %v546 = vunpack.c.l.b16 %v526
    %v547 = vrot.slane %v540, 7
    %vm548 = vcmask 1041409
    %v549 = vsel %vm548, %v547, %v539
    %v550 = vrot.slane %v541, 6
    %vm551 = vcmask 1042434
    %v552 = vsel %vm551, %v550, %v549
    %v553 = vrot.slane %v542, 5
    %vm554 = vcmask 1043459
    %v555 = vsel %vm554, %v553, %v552
    %v556 = vrot.slane %v543, 4
    %vm557 = vcmask 1044484
    %v558 = vsel %vm557, %v556, %v555
    %v559 = vrot.slane %v544, 3
    %vm560 = vcmask 1045509
    %v561 = vsel %vm560, %v559, %v558
    %v562 = vrot.slane %v545, 2
    %vm563 = vcmask 1046534
    %v564 = vsel %vm563, %v562, %v561
    %v565 = vrot.slane %v546, 1
    %vm566 = vcmask 1047559
    %v567 = vsel %vm566, %v565, %v564
    %v568 = vpack.c.b16 %v567, %v567
    %v570 = vsel %vm173, %v568, 0
    %v573 = vsel %vm186, %v498, 0
    %575 = vmatprep.subr.bf16.mxu0 0
    %576 = vmatpush1.bf16.msra.mxu0 %v573
    %577 = vmatprep.subr.bf16.mxu0 0
    %578 = vmatpush1.bf16.msra.mxu0 0
    %579 = vmatprep.subr.bf16.mxu0 0
    %580 = vmatpush1.bf16.msra.mxu0 0
    %581 = vmatprep.subr.bf16.mxu0 0
    %582 = vmatpush1.bf16.msra.mxu0 0
    %583 = vmatprep.subr.bf16.mxu0 0
    %584 = vmatpush1.bf16.msra.mxu0 0
    %585 = vmatprep.subr.bf16.mxu0 0
    %586 = vmatpush1.bf16.msra.mxu0 0
    %587 = vmatprep.subr.bf16.mxu0 0
    %588 = vmatpush1.bf16.msra.mxu0 0
    %589 = vmatprep.subr.bf16.mxu0 0
    %590 = vmatpush1.bf16.msra.mxu0 0
    %591 = vmatprep.subr.bf16.mxu0 0
    %592 = vmatpush1.bf16.msra.mxu0 0
    %593 = vmatprep.subr.bf16.mxu0 0
    %594 = vmatpush1.bf16.msra.mxu0 0
    %595 = vmatprep.subr.bf16.mxu0 0
    %596 = vmatpush1.bf16.msra.mxu0 0
    %597 = vmatprep.subr.bf16.mxu0 0
    %598 = vmatpush1.bf16.msra.mxu0 0
    %599 = vmatprep.subr.bf16.mxu0 0
    %600 = vmatpush1.bf16.msra.mxu0 0
    %601 = vmatprep.subr.bf16.mxu0 0
    %602 = vmatpush1.bf16.msra.mxu0 0
    %603 = vmatprep.subr.bf16.mxu0 0
    %604 = vmatpush1.bf16.msra.mxu0 0
    %605 = vmatprep.subr.bf16.mxu0 0
    %606 = vmatpush1.bf16.msra.mxu0 0
    %607 = vmatprep.mubr.bf16.mxu0 0
    %608 = vmatmul.mubr.bf16.gmra.mrb[0].mxu0 %v570
    %v609 = vpop.f32.mrb[0].mxu0
    %v610 = vadd.f32 %v530, %v609
    %v611 = vpop.f32.mrb[0].mxu0
    %v612 = vpop.f32.mrb[0].mxu0
    %v613 = vpop.f32.mrb[0].mxu0
    %614 = vdwg.mxu0
    %v615 = vmax.f32 %v610, 0.0
    %v616 = vpack.c.bf16 %v615, %v615
    %v617 = vlaneseq
    %v618 = vshrl.u32 %v617, 7
    %v619 = vsub.s32 0, %v618
    %v620 = vrot.slane %v508, %v619
    %v629 = vunpack.c.l.b16 %v500
    %v630 = vunpack.c.l.b16 %v501
    %v631 = vunpack.c.l.b16 %v502
    %v632 = vunpack.c.l.b16 %v503
    %v633 = vunpack.c.l.b16 %v504
    %v634 = vunpack.c.l.b16 %v505
    %v635 = vunpack.c.l.b16 %v506
    %v636 = vunpack.c.l.b16 %v507
    %v637 = vpack.c.b16 %v630, %v629
    %v638 = vpack.c.b16 %v632, %v631
    %v639 = vpack.c.b16 %v634, %v633
    %v640 = vpack.c.b16 %v636, %v635
    %v646 = vsel %vm295, %v616, 0
    %648 = vmatprep.subr.bf16.mxu0 0
    %649 = vmatpush1.bf16.msra.mxu0 %v637
    %650 = vmatprep.subr.bf16.mxu0 0
    %651 = vmatpush1.bf16.msra.mxu0 %v638
    %652 = vmatprep.subr.bf16.mxu0 0
    %653 = vmatpush1.bf16.msra.mxu0 %v639
    %654 = vmatprep.subr.bf16.mxu0 0
    %655 = vmatpush1.bf16.msra.mxu0 %v640
    %656 = vmatprep.subr.bf16.mxu0 0
    %657 = vmatpush1.bf16.msra.mxu0 0
    %658 = vmatprep.subr.bf16.mxu0 0
    %659 = vmatpush1.bf16.msra.mxu0 0
    %660 = vmatprep.subr.bf16.mxu0 0
    %661 = vmatpush1.bf16.msra.mxu0 0
    %662 = vmatprep.subr.bf16.mxu0 0
    %663 = vmatpush1.bf16.msra.mxu0 0
    %664 = vmatprep.subr.bf16.mxu0 0
    %665 = vmatpush1.bf16.msra.mxu0 0
    %666 = vmatprep.subr.bf16.mxu0 0
    %667 = vmatpush1.bf16.msra.mxu0 0
    %668 = vmatprep.subr.bf16.mxu0 0
    %669 = vmatpush1.bf16.msra.mxu0 0
    %670 = vmatprep.subr.bf16.mxu0 0
    %671 = vmatpush1.bf16.msra.mxu0 0
    %672 = vmatprep.subr.bf16.mxu0 0
    %673 = vmatpush1.bf16.msra.mxu0 0
    %674 = vmatprep.subr.bf16.mxu0 0
    %675 = vmatpush1.bf16.msra.mxu0 0
    %676 = vmatprep.subr.bf16.mxu0 0
    %677 = vmatpush1.bf16.msra.mxu0 0
    %678 = vmatprep.subr.bf16.mxu0 0
    %679 = vmatpush1.bf16.msra.mxu0 0
    %680 = vmatprep.mubr.bf16.mxu0 0
    %681 = vmatmul.mubr.bf16.gmra.mrb[0].mxu0 %v646
    %v682 = vpop.f32.mrb[0].mxu0
    %v683 = vadd.f32 %v620, %v682
    %v684 = vpop.f32.mrb[0].mxu0
    %v685 = vpop.f32.mrb[0].mxu0
    %v686 = vpop.f32.mrb[0].mxu0
    %687 = vdwg.mxu0
    %v688 = vmax.f32 %v683, 0.0
    %v689 = vpack.c.bf16 %v688, %v688
    %v690 = vlaneseq
    %v691 = vshrl.u32 %v690, 7
    %v692 = vsub.s32 0, %v691
    %v693 = vrot.slane %v518, %v692
    %v702 = vunpack.c.l.b16 %v510
    %v703 = vunpack.c.l.b16 %v511
    %v704 = vunpack.c.l.b16 %v512
    %v705 = vunpack.c.l.b16 %v513
    %v706 = vunpack.c.l.b16 %v514
    %v707 = vunpack.c.l.b16 %v515
    %v708 = vunpack.c.l.b16 %v516
    %v709 = vunpack.c.l.b16 %v517
    %v710 = vpack.c.b16 %v703, %v702
    %v711 = vpack.c.b16 %v705, %v704
    %v712 = vpack.c.b16 %v707, %v706
    %v713 = vpack.c.b16 %v709, %v708
    %v719 = vsel %vm295, %v689, 0
    %721 = vmatprep.subr.bf16.mxu0 0
    %722 = vmatpush1.bf16.msra.mxu0 %v710
    %723 = vmatprep.subr.bf16.mxu0 0
    %724 = vmatpush1.bf16.msra.mxu0 %v711
    %725 = vmatprep.subr.bf16.mxu0 0
    %726 = vmatpush1.bf16.msra.mxu0 %v712
    %727 = vmatprep.subr.bf16.mxu0 0
    %728 = vmatpush1.bf16.msra.mxu0 %v713
    %729 = vmatprep.subr.bf16.mxu0 0
    %730 = vmatpush1.bf16.msra.mxu0 0
    %731 = vmatprep.subr.bf16.mxu0 0
    %732 = vmatpush1.bf16.msra.mxu0 0
    %733 = vmatprep.subr.bf16.mxu0 0
    %734 = vmatpush1.bf16.msra.mxu0 0
    %735 = vmatprep.subr.bf16.mxu0 0
    %736 = vmatpush1.bf16.msra.mxu0 0
    %737 = vmatprep.subr.bf16.mxu0 0
    %738 = vmatpush1.bf16.msra.mxu0 0
    %739 = vmatprep.subr.bf16.mxu0 0
    %740 = vmatpush1.bf16.msra.mxu0 0
    %741 = vmatprep.subr.bf16.mxu0 0
    %742 = vmatpush1.bf16.msra.mxu0 0
    %743 = vmatprep.subr.bf16.mxu0 0
    %744 = vmatpush1.bf16.msra.mxu0 0
    %745 = vmatprep.subr.bf16.mxu0 0
    %746 = vmatpush1.bf16.msra.mxu0 0
    %747 = vmatprep.subr.bf16.mxu0 0
    %748 = vmatpush1.bf16.msra.mxu0 0
    %749 = vmatprep.subr.bf16.mxu0 0
    %750 = vmatpush1.bf16.msra.mxu0 0
    %751 = vmatprep.subr.bf16.mxu0 0
    %752 = vmatpush1.bf16.msra.mxu0 0
    %753 = vmatprep.mubr.bf16.mxu0 0
    %754 = vmatmul.mubr.bf16.gmra.mrb[0].mxu0 %v719
    %v755 = vpop.f32.mrb[0].mxu0
    %v756 = vadd.f32 %v693, %v755
    %v757 = vpop.f32.mrb[0].mxu0
    %v758 = vpop.f32.mrb[0].mxu0
    %v759 = vpop.f32.mrb[0].mxu0
    %760 = vdwg.mxu0
    %v761 = vmax.f32 %v756, 0.0
    %v762 = vlaneseq
    %v763 = vshrl.u32 %v762, 7
    %vm764 = vcmp.eq.s32.totalorder %v763, 0
    %v766 = vcombine.high %v761, %v761
    %v768 = vunpack.c.l.s4 1966171168
    %v769 = vunpack.c.0.s8 %v768
    %v770 = vlaneseq
    %v771 = vshrl.u32 %v770, 7
    %v772 = vsub.s32 %v769, %v771
    %v773 = vrot.slane %v761, %v772
    %v775 = vunpack.c.l.s4 1966171168
    %v776 = vunpack.c.0.s8 %v775
    %v777 = vlaneseq
    %v778 = vshrl.u32 %v777, 7
    %v779 = vsub.s32 %v776, %v778
    %v780 = vrot.slane %v766, %v779
    %v781 = vcombine.high %v773, %v773
    %v782 = vcombine.high %v780, %v780
    %v784 = vunpack.c.l.s4 1966171168
    %v785 = vunpack.c.0.s8 %v784
    %v786 = vlaneseq
    %v787 = vshrl.u32 %v786, 7
    %v788 = vsub.s32 %v785, %v787
    %v789 = vrot.slane %v773, %v788
    %v791 = vunpack.c.l.s4 1966171168
    %v792 = vunpack.c.0.s8 %v791
    %v793 = vlaneseq
    %v794 = vshrl.u32 %v793, 7
    %v795 = vsub.s32 %v792, %v794
    %v796 = vrot.slane %v780, %v795
    %v798 = vunpack.c.l.s4 1966171168
    %v799 = vunpack.c.0.s8 %v798
    %v800 = vlaneseq
    %v801 = vshrl.u32 %v800, 7
    %v802 = vsub.s32 %v799, %v801
    %v803 = vrot.slane %v781, %v802
    %v805 = vunpack.c.l.s4 1966171168
    %v806 = vunpack.c.0.s8 %v805
    %v807 = vlaneseq
    %v808 = vshrl.u32 %v807, 7
    %v809 = vsub.s32 %v806, %v808
    %v810 = vrot.slane %v782, %v809
    %v811 = vcombine.high %v789, %v789
    %v812 = vcombine.high %v796, %v796
    %v813 = vcombine.high %v803, %v803
    %v814 = vcombine.high %v810, %v810
    %v815 = vsel %vm764, 1, 0
    %vm816 = vcmp.eq.s32.totalorder %v815, 1
    %v817 = vlaneseq
    %v818 = vshrl.u32 %v817, 7
    %v819 = vsub.s32 0, %v818
    %v820 = vrot.slane %v789, %v819
    %v821 = vlaneseq
    %v822 = vshrl.u32 %v821, 7
    %v823 = vsub.s32 0, %v822
    %v824 = vrot.slane %v803, %v823
    %v825 = vlaneseq
    %v826 = vshrl.u32 %v825, 7
    %v827 = vsub.s32 0, %v826
    %v828 = vrot.slane %v811, %v827
    %v829 = vlaneseq
    %v830 = vshrl.u32 %v829, 7
    %v831 = vsub.s32 0, %v830
    %v832 = vrot.slane %v813, %v831
    %v833 = vlaneseq
    %v834 = vshrl.u32 %v833, 7
    %v835 = vsub.s32 0, %v834
    %v836 = vrot.slane %v796, %v835
    %v837 = vlaneseq
    %v838 = vshrl.u32 %v837, 7
    %v839 = vsub.s32 0, %v838
    %v840 = vrot.slane %v810, %v839
    %v841 = vlaneseq
    %v842 = vshrl.u32 %v841, 7
    %v843 = vsub.s32 0, %v842
    %v844 = vrot.slane %v812, %v843
    %v845 = vlaneseq
    %v846 = vshrl.u32 %v845, 7
    %v847 = vsub.s32 0, %v846
    %v848 = vrot.slane %v814, %v847
    %v857 = vsel %vm816, %v820, %v490
    %v858 = vsel %vm816, %v824, %v491
    %v859 = vsel %vm816, %v828, %v492
    %v860 = vsel %vm816, %v832, %v493
    %v861 = vsel %vm816, %v836, %v494
    %v862 = vsel %vm816, %v840, %v495
    %v863 = vsel %vm816, %v844, %v496
    %v864 = vsel %vm816, %v848, %v497
    %v865 = vpack.c.bf16 %v858, %v857
    %v866 = vpack.c.bf16 %v860, %v859
    %v867 = vpack.c.bf16 %v862, %v861
    %v868 = vpack.c.bf16 %v864, %v863
    %v869 = vld [vmem:[#allocation8] sm:$0xf]
    %v870 = vld [vmem:[#allocation8 + $0x4] sm:$0xf]
    %v871 = vld [vmem:[#allocation8 + $0x8] sm:$0xf]
    %v872 = vld [vmem:[#allocation8 + $0xc] sm:$0xf]
    %v873 = vld [vmem:[#allocation8 + $0x10] sm:$0xf]
    %v874 = vld [vmem:[#allocation8 + $0x14] sm:$0xf]
    %v875 = vld [vmem:[#allocation8 + $0x18] sm:$0xf]
    %v876 = vld [vmem:[#allocation8 + $0x1c] sm:$0xf]
    %v885 = vunpack.c.l.b16 %v869
    %v886 = vunpack.c.l.b16 %v870
    %v887 = vunpack.c.l.b16 %v871
    %v888 = vunpack.c.l.b16 %v872
    %v889 = vunpack.c.l.b16 %v873
    %v890 = vunpack.c.l.b16 %v874
    %v891 = vunpack.c.l.b16 %v875
    %v892 = vunpack.c.l.b16 %v876
    %v893 = vpack.c.b16 %v886, %v885
    %v894 = vpack.c.b16 %v888, %v887
    %v895 = vpack.c.b16 %v890, %v889
    %v896 = vpack.c.b16 %v892, %v891
    %v902 = vsel %vm295, %v865, 0
    %v905 = vsel %vm295, %v866, 0
    %v908 = vsel %vm295, %v867, 0
    %v911 = vsel %vm295, %v868, 0
    %913 = vmatprep.subr.bf16.mxu0 0
    %914 = vmatpush1.bf16.msra.mxu0 %v893
    %915 = vmatprep.subr.bf16.mxu0 0
    %916 = vmatpush1.bf16.msra.mxu0 %v894
    %917 = vmatprep.subr.bf16.mxu0 0
    %918 = vmatpush1.bf16.msra.mxu0 %v895
    %919 = vmatprep.subr.bf16.mxu0 0
    %920 = vmatpush1.bf16.msra.mxu0 %v896
    %921 = vmatprep.subr.bf16.mxu0 0
    %922 = vmatpush1.bf16.msra.mxu0 0
    %923 = vmatprep.subr.bf16.mxu0 0
    %924 = vmatpush1.bf16.msra.mxu0 0
    %925 = vmatprep.subr.bf16.mxu0 0
    %926 = vmatpush1.bf16.msra.mxu0 0
    %927 = vmatprep.subr.bf16.mxu0 0
    %928 = vmatpush1.bf16.msra.mxu0 0
    %929 = vmatprep.subr.bf16.mxu0 0
    %930 = vmatpush1.bf16.msra.mxu0 0
    %931 = vmatprep.subr.bf16.mxu0 0
    %932 = vmatpush1.bf16.msra.mxu0 0
    %933 = vmatprep.subr.bf16.mxu0 0
    %934 = vmatpush1.bf16.msra.mxu0 0
    %935 = vmatprep.subr.bf16.mxu0 0
    %936 = vmatpush1.bf16.msra.mxu0 0
    %937 = vmatprep.subr.bf16.mxu0 0
    %938 = vmatpush1.bf16.msra.mxu0 0
    %939 = vmatprep.subr.bf16.mxu0 0
    %940 = vmatpush1.bf16.msra.mxu0 0
    %941 = vmatprep.subr.bf16.mxu0 0
    %942 = vmatpush1.bf16.msra.mxu0 0
    %943 = vmatprep.subr.bf16.mxu0 0
    %944 = vmatpush1.bf16.msra.mxu0 0
    %945 = vmatprep.mubr.bf16.mxu0 0
    %946 = vmatmul.mubr.bf16.gmra.mrb[0].mxu0 %v902
    %v947 = vpop.f32.mrb[0].mxu0
    %v948 = vadd.f32 0.0, %v947
    %v949 = vpop.f32.mrb[0].mxu0
    %v950 = vpop.f32.mrb[0].mxu0
    %v951 = vadd.f32 0.0, %v950
    %v952 = vpop.f32.mrb[0].mxu0
    %953 = vmatprep.mubr.bf16.mxu0 0
    %954 = vmatmul.mubr.bf16.gmra.mrb[0].mxu0 %v905
    %v955 = vpop.f32.mrb[0].mxu0
    %v956 = vadd.f32 0.0, %v955
    %v957 = vpop.f32.mrb[0].mxu0
    %v958 = vpop.f32.mrb[0].mxu0
    %v959 = vadd.f32 0.0, %v958
    %v960 = vpop.f32.mrb[0].mxu0
    %961 = vmatprep.mubr.bf16.mxu0 0
    %962 = vmatmul.mubr.bf16.gmra.mrb[0].mxu0 %v908
    %v963 = vpop.f32.mrb[0].mxu0
    %v964 = vadd.f32 0.0, %v963
    %v965 = vpop.f32.mrb[0].mxu0
    %v966 = vpop.f32.mrb[0].mxu0
    %v967 = vadd.f32 0.0, %v966
    %v968 = vpop.f32.mrb[0].mxu0
    %969 = vmatprep.mubr.bf16.mxu0 0
    %970 = vmatmul.mubr.bf16.gmra.mrb[0].mxu0 %v911
    %v971 = vpop.f32.mrb[0].mxu0
    %v972 = vadd.f32 0.0, %v971
    %v973 = vpop.f32.mrb[0].mxu0
    %v974 = vpop.f32.mrb[0].mxu0
    %v975 = vadd.f32 0.0, %v974
    %v976 = vpop.f32.mrb[0].mxu0
    %977 = vdwg.mxu0
    %v978 = vpack.c.bf16 %v761, %v761
    %s979 = scalar_lea.vmem [#allocation7], 128
    %v980 = vld [vmem:[%s979] sm:$0xf]
    %v981 = vld [vmem:[%s979 + $0x4] sm:$0xf]
    %v982 = vld [vmem:[%s979 + $0x8] sm:$0xf]
    %v983 = vld [vmem:[%s979 + $0xc] sm:$0xf]
    %v984 = vld [vmem:[%s979 + $0x10] sm:$0xf]
    %v985 = vld [vmem:[%s979 + $0x14] sm:$0xf]
    %v986 = vld [vmem:[%s979 + $0x18] sm:$0xf]
    %v987 = vld [vmem:[%s979 + $0x1c] sm:$0xf]
    %v996 = vunpack.c.l.b16 %v980
    %v997 = vunpack.c.l.b16 %v981
    %v998 = vunpack.c.l.b16 %v982
    %v999 = vunpack.c.l.b16 %v983
    %v1000 = vunpack.c.l.b16 %v984
    %v1001 = vunpack.c.l.b16 %v985
    %v1002 = vunpack.c.l.b16 %v986
    %v1003 = vunpack.c.l.b16 %v987
    %v1004 = vpack.c.b16 %v997, %v996
    %v1005 = vpack.c.b16 %v999, %v998
    %v1006 = vpack.c.b16 %v1001, %v1000
    %v1007 = vpack.c.b16 %v1003, %v1002
    %v1013 = vsel %vm295, %v978, 0
    %1015 = vmatprep.subr.bf16.mxu0 0
    %1016 = vmatpush1.bf16.msra.mxu0 %v1004
    %1017 = vmatprep.subr.bf16.mxu0 0
    %1018 = vmatpush1.bf16.msra.mxu0 %v1005
    %1019 = vmatprep.subr.bf16.mxu0 0
    %1020 = vmatpush1.bf16.msra.mxu0 %v1006
    %1021 = vmatprep.subr.bf16.mxu0 0
    %1022 = vmatpush1.bf16.msra.mxu0 %v1007
    %1023 = vmatprep.subr.bf16.mxu0 0
    %1024 = vmatpush1.bf16.msra.mxu0 0
    %1025 = vmatprep.subr.bf16.mxu0 0
    %1026 = vmatpush1.bf16.msra.mxu0 0
    %1027 = vmatprep.subr.bf16.mxu0 0
    %1028 = vmatpush1.bf16.msra.mxu0 0
    %1029 = vmatprep.subr.bf16.mxu0 0
    %1030 = vmatpush1.bf16.msra.mxu0 0
    %1031 = vmatprep.subr.bf16.mxu0 0
    %1032 = vmatpush1.bf16.msra.mxu0 0
    %1033 = vmatprep.subr.bf16.mxu0 0
    %1034 = vmatpush1.bf16.msra.mxu0 0
    %1035 = vmatprep.subr.bf16.mxu0 0
    %1036 = vmatpush1.bf16.msra.mxu0 0
    %1037 = vmatprep.subr.bf16.mxu0 0
    %1038 = vmatpush1.bf16.msra.mxu0 0
    %1039 = vmatprep.subr.bf16.mxu0 0
    %1040 = vmatpush1.bf16.msra.mxu0 0
    %1041 = vmatprep.subr.bf16.mxu0 0
    %1042 = vmatpush1.bf16.msra.mxu0 0
    %1043 = vmatprep.subr.bf16.mxu0 0
    %1044 = vmatpush1.bf16.msra.mxu0 0
    %1045 = vmatprep.subr.bf16.mxu0 0
    %1046 = vmatpush1.bf16.msra.mxu0 0
    %1047 = vmatprep.mubr.bf16.mxu0 0
    %1048 = vmatmul.mubr.bf16.gmra.mrb[0].mxu0 %v1013
    %v1049 = vpop.f32.mrb[0].mxu0
    %v1050 = vadd.f32 0.0, %v1049
    %v1051 = vpop.f32.mrb[0].mxu0
    %v1052 = vpop.f32.mrb[0].mxu0
    %v1053 = vpop.f32.mrb[0].mxu0
    %1054 = vdwg.mxu0
    %v1056 = vcombine.high %v1050, %v1050
    %v1058 = vunpack.c.l.s4 1966171168
    %v1059 = vunpack.c.0.s8 %v1058
    %v1060 = vlaneseq
    %v1061 = vshrl.u32 %v1060, 7
    %v1062 = vsub.s32 %v1059, %v1061
    %v1063 = vrot.slane %v1050, %v1062
    %v1065 = vunpack.c.l.s4 1966171168
    %v1066 = vunpack.c.0.s8 %v1065
    %v1067 = vlaneseq
    %v1068 = vshrl.u32 %v1067, 7
    %v1069 = vsub.s32 %v1066, %v1068
    %v1070 = vrot.slane %v1056, %v1069
    %v1071 = vcombine.high %v1063, %v1063
    %v1072 = vcombine.high %v1070, %v1070
    %v1074 = vunpack.c.l.s4 1966171168
    %v1075 = vunpack.c.0.s8 %v1074
    %v1076 = vlaneseq
    %v1077 = vshrl.u32 %v1076, 7
    %v1078 = vsub.s32 %v1075, %v1077
    %v1079 = vrot.slane %v1063, %v1078
    %v1081 = vunpack.c.l.s4 1966171168
    %v1082 = vunpack.c.0.s8 %v1081
    %v1083 = vlaneseq
    %v1084 = vshrl.u32 %v1083, 7
    %v1085 = vsub.s32 %v1082, %v1084
    %v1086 = vrot.slane %v1070, %v1085
    %v1088 = vunpack.c.l.s4 1966171168
    %v1089 = vunpack.c.0.s8 %v1088
    %v1090 = vlaneseq
    %v1091 = vshrl.u32 %v1090, 7
    %v1092 = vsub.s32 %v1089, %v1091
    %v1093 = vrot.slane %v1071, %v1092
    %v1095 = vunpack.c.l.s4 1966171168
    %v1096 = vunpack.c.0.s8 %v1095
    %v1097 = vlaneseq
    %v1098 = vshrl.u32 %v1097, 7
    %v1099 = vsub.s32 %v1096, %v1098
    %v1100 = vrot.slane %v1072, %v1099
    %v1101 = vcombine.high %v1079, %v1079
    %v1102 = vcombine.high %v1086, %v1086
    %v1103 = vcombine.high %v1093, %v1093
    %v1104 = vcombine.high %v1100, %v1100
    %v1105 = vlaneseq
    %v1106 = vshrl.u32 %v1105, 7
    %v1107 = vsub.s32 0, %v1106
    %v1108 = vrot.slane %v1079, %v1107
    %v1109 = vlaneseq
    %v1110 = vshrl.u32 %v1109, 7
    %v1111 = vsub.s32 0, %v1110
    %v1112 = vrot.slane %v1093, %v1111
    %v1113 = vlaneseq
    %v1114 = vshrl.u32 %v1113, 7
    %v1115 = vsub.s32 0, %v1114
    %v1116 = vrot.slane %v1101, %v1115
    %v1117 = vlaneseq
    %v1118 = vshrl.u32 %v1117, 7
    %v1119 = vsub.s32 0, %v1118
    %v1120 = vrot.slane %v1103, %v1119
    %v1121 = vlaneseq
    %v1122 = vshrl.u32 %v1121, 7
    %v1123 = vsub.s32 0, %v1122
    %v1124 = vrot.slane %v1086, %v1123
    %v1125 = vlaneseq
    %v1126 = vshrl.u32 %v1125, 7
    %v1127 = vsub.s32 0, %v1126
    %v1128 = vrot.slane %v1100, %v1127
    %v1129 = vlaneseq
    %v1130 = vshrl.u32 %v1129, 7
    %v1131 = vsub.s32 0, %v1130
    %v1132 = vrot.slane %v1102, %v1131
    %v1133 = vlaneseq
    %v1134 = vshrl.u32 %v1133, 7
    %v1135 = vsub.s32 0, %v1134
    %v1136 = vrot.slane %v1104, %v1135
    %v1145 = vmul.f32 %v948, %v1108
    %v1146 = vmul.f32 %v951, %v1112
    %v1147 = vmul.f32 %v956, %v1116
    %v1148 = vmul.f32 %v959, %v1120
    %v1149 = vmul.f32 %v964, %v1124
    %v1150 = vmul.f32 %v967, %v1128
    %v1151 = vmul.f32 %v972, %v1132
    %v1152 = vmul.f32 %v975, %v1136
    %v1153 = vpack.c.bf16 %v1146, %v1145
    %v1154 = vpack.c.bf16 %v1148, %v1147
    %v1155 = vpack.c.bf16 %v1150, %v1149
    %v1156 = vpack.c.bf16 %v1152, %v1151
    %v1157 = vld [vmem:[#allocation13] sm:$0xf]
    %v1158 = vld [vmem:[#allocation13 + $0x4] sm:$0xf]
    %v1159 = vld [vmem:[#allocation13 + $0x8] sm:$0xf]
    %v1160 = vld [vmem:[#allocation13 + $0xc] sm:$0xf]
    %v1161 = vld [vmem:[#allocation13 + $0x10] sm:$0xf]
    %v1162 = vld [vmem:[#allocation13 + $0x14] sm:$0xf]
    %v1163 = vld [vmem:[#allocation13 + $0x18] sm:$0xf]
    %v1164 = vld [vmem:[#allocation13 + $0x1c] sm:$0xf]
    %v1173 = vunpack.c.l.b16 %v1157
    %v1174 = vunpack.c.l.b16 %v1158
    %v1175 = vunpack.c.l.b16 %v1159
    %v1176 = vunpack.c.l.b16 %v1160
    %v1177 = vunpack.c.l.b16 %v1161
    %v1178 = vunpack.c.l.b16 %v1162
    %v1179 = vunpack.c.l.b16 %v1163
    %v1180 = vunpack.c.l.b16 %v1164
    %v1181 = vpack.c.b16 %v1174, %v1173
    %v1182 = vpack.c.b16 %v1176, %v1175
    %v1183 = vpack.c.b16 %v1178, %v1177
    %v1184 = vpack.c.b16 %v1180, %v1179
    %v1190 = vsel %vm295, %v1153, 0
    %v1193 = vsel %vm295, %v1154, 0
    %v1196 = vsel %vm295, %v1155, 0
    %v1199 = vsel %vm295, %v1156, 0
    %1201 = vmatprep.subr.bf16.mxu0 0
    %1202 = vmatpush1.bf16.msra.mxu0 %v1181
    %1203 = vmatprep.subr.bf16.mxu0 0
    %1204 = vmatpush1.bf16.msra.mxu0 %v1182
    %1205 = vmatprep.subr.bf16.mxu0 0
    %1206 = vmatpush1.bf16.msra.mxu0 %v1183
    %1207 = vmatprep.subr.bf16.mxu0 0
    %1208 = vmatpush1.bf16.msra.mxu0 %v1184
    %1209 = vmatprep.subr.bf16.mxu0 0
    %1210 = vmatpush1.bf16.msra.mxu0 0
    %1211 = vmatprep.subr.bf16.mxu0 0
    %1212 = vmatpush1.bf16.msra.mxu0 0
    %1213 = vmatprep.subr.bf16.mxu0 0
    %1214 = vmatpush1.bf16.msra.mxu0 0
    %1215 = vmatprep.subr.bf16.mxu0 0
    %1216 = vmatpush1.bf16.msra.mxu0 0
    %1217 = vmatprep.subr.bf16.mxu0 0
    %1218 = vmatpush1.bf16.msra.mxu0 0
    %1219 = vmatprep.subr.bf16.mxu0 0
    %1220 = vmatpush1.bf16.msra.mxu0 0
    %1221 = vmatprep.subr.bf16.mxu0 0
    %1222 = vmatpush1.bf16.msra.mxu0 0
    %1223 = vmatprep.subr.bf16.mxu0 0
    %1224 = vmatpush1.bf16.msra.mxu0 0
    %1225 = vmatprep.subr.bf16.mxu0 0
    %1226 = vmatpush1.bf16.msra.mxu0 0
    %1227 = vmatprep.subr.bf16.mxu0 0
    %1228 = vmatpush1.bf16.msra.mxu0 0
    %1229 = vmatprep.subr.bf16.mxu0 0
    %1230 = vmatpush1.bf16.msra.mxu0 0
    %1231 = vmatprep.subr.bf16.mxu0 0
    %1232 = vmatpush1.bf16.msra.mxu0 0
    %1233 = vmatprep.mubr.bf16.mxu0 0
    %1234 = vmatmul.mubr.bf16.gmra.mrb[0].mxu0 %v1190
    %v1235 = vpop.f32.mrb[0].mxu0
    %v1236 = vadd.f32 0.0, %v1235
    %v1237 = vpop.f32.mrb[0].mxu0
    %v1238 = vpop.f32.mrb[0].mxu0
    %v1239 = vadd.f32 0.0, %v1238
    %v1240 = vpop.f32.mrb[0].mxu0
    %1241 = vmatprep.mubr.bf16.mxu0 0
    %1242 = vmatmul.mubr.bf16.gmra.mrb[0].mxu0 %v1193
    %v1243 = vpop.f32.mrb[0].mxu0
    %v1244 = vadd.f32 0.0, %v1243
    %v1245 = vpop.f32.mrb[0].mxu0
    %v1246 = vpop.f32.mrb[0].mxu0
    %v1247 = vadd.f32 0.0, %v1246
    %v1248 = vpop.f32.mrb[0].mxu0
    %1249 = vmatprep.mubr.bf16.mxu0 0
    %1250 = vmatmul.mubr.bf16.gmra.mrb[0].mxu0 %v1196
    %v1251 = vpop.f32.mrb[0].mxu0
    %v1252 = vadd.f32 0.0, %v1251
    %v1253 = vpop.f32.mrb[0].mxu0
    %v1254 = vpop.f32.mrb[0].mxu0
    %v1255 = vadd.f32 0.0, %v1254
    %v1256 = vpop.f32.mrb[0].mxu0
    %1257 = vmatprep.mubr.bf16.mxu0 0
    %1258 = vmatmul.mubr.bf16.gmra.mrb[0].mxu0 %v1199
    %v1259 = vpop.f32.mrb[0].mxu0
    %v1260 = vadd.f32 0.0, %v1259
    %v1261 = vpop.f32.mrb[0].mxu0
    %v1262 = vpop.f32.mrb[0].mxu0
    %v1263 = vadd.f32 0.0, %v1262
    %v1264 = vpop.f32.mrb[0].mxu0
    %1265 = vdwg.mxu0
    %v1266 = vsel %vm134, 1, 0
    %v1267 = vsel %vm135, 1, 0
    %v1268 = vsel %vm136, 1, 0
    %v1269 = vsel %vm137, 1, 0
    %v1270 = vsel %vm138, 1, 0
    %v1271 = vsel %vm139, 1, 0
    %v1272 = vsel %vm140, 1, 0
    %v1273 = vsel %vm141, 1, 0
    %1274 = vset.pattern.permute.xlu0 0
    %1275 = vperm.xlu0 %1274, %v1266
    %v1276 = vpop.permute.xlu0 %1275
    %1277 = vset.pattern.permute.xlu0 0
    %1278 = vperm.xlu0 %1277, %v1267
    %v1279 = vpop.permute.xlu0 %1278
    %1280 = vset.pattern.permute.xlu0 0
    %1281 = vperm.xlu0 %1280, %v1268
    %v1282 = vpop.permute.xlu0 %1281
    %1283 = vset.pattern.permute.xlu0 0
    %1284 = vperm.xlu0 %1283, %v1269
    %v1285 = vpop.permute.xlu0 %1284
    %1286 = vset.pattern.permute.xlu0 0
    %1287 = vperm.xlu0 %1286, %v1270
    %v1288 = vpop.permute.xlu0 %1287
    %1289 = vset.pattern.permute.xlu0 0
    %1290 = vperm.xlu0 %1289, %v1271
    %v1291 = vpop.permute.xlu0 %1290
    %1292 = vset.pattern.permute.xlu0 0
    %1293 = vperm.xlu0 %1292, %v1272
    %v1294 = vpop.permute.xlu0 %1293
    %1295 = vset.pattern.permute.xlu0 0
    %1296 = vperm.xlu0 %1295, %v1273
    %v1297 = vpop.permute.xlu0 %1296
    %vm1298 = vcmp.eq.s32.totalorder %v1276, 1
    %vm1299 = vcmp.eq.s32.totalorder %v1279, 1
    %vm1300 = vcmp.eq.s32.totalorder %v1282, 1
    %vm1301 = vcmp.eq.s32.totalorder %v1285, 1
    %vm1302 = vcmp.eq.s32.totalorder %v1288, 1
    %vm1303 = vcmp.eq.s32.totalorder %v1291, 1
    %vm1304 = vcmp.eq.s32.totalorder %v1294, 1
    %vm1305 = vcmp.eq.s32.totalorder %v1297, 1
    %v1306 = vsel %vm1298, -1e+09, %v1236
    %v1307 = vsel %vm1299, -1e+09, %v1239
    %v1308 = vsel %vm1300, -1e+09, %v1244
    %v1309 = vsel %vm1301, -1e+09, %v1247
    %v1310 = vsel %vm1302, -1e+09, %v1252
    %v1311 = vsel %vm1303, -1e+09, %v1255
    %v1312 = vsel %vm1304, -1e+09, %v1260
    %v1313 = vsel %vm1305, -1e+09, %v1263
    %v1314 = vsel %vm295, %v1306, -inf
    %v1315 = vrot.slane %v1314, 4
    %v1316 = vmax.f32 %v1314, %v1315
    %v1317 = vrot.slane %v1316, 2
    %v1318 = vmax.f32 %v1316, %v1317
    %v1319 = vrot.slane %v1318, 1
    %v1320 = vmax.f32 %v1318, %v1319
    %v1321 = vsel %vm295, %v1307, -inf
    %v1322 = vrot.slane %v1321, 4
    %v1323 = vmax.f32 %v1321, %v1322
    %v1324 = vrot.slane %v1323, 2
    %v1325 = vmax.f32 %v1323, %v1324
    %v1326 = vrot.slane %v1325, 1
    %v1327 = vmax.f32 %v1325, %v1326
    %v1328 = vsel %vm295, %v1308, -inf
    %v1329 = vrot.slane %v1328, 4
    %v1330 = vmax.f32 %v1328, %v1329
    %v1331 = vrot.slane %v1330, 2
    %v1332 = vmax.f32 %v1330, %v1331
    %v1333 = vrot.slane %v1332, 1
    %v1334 = vmax.f32 %v1332, %v1333
    %v1335 = vsel %vm295, %v1309, -inf
    %v1336 = vrot.slane %v1335, 4
    %v1337 = vmax.f32 %v1335, %v1336
    %v1338 = vrot.slane %v1337, 2
    %v1339 = vmax.f32 %v1337, %v1338
    %v1340 = vrot.slane %v1339, 1
    %v1341 = vmax.f32 %v1339, %v1340
    %v1342 = vsel %vm295, %v1310, -inf
    %v1343 = vrot.slane %v1342, 4
    %v1344 = vmax.f32 %v1342, %v1343
    %v1345 = vrot.slane %v1344, 2
    %v1346 = vmax.f32 %v1344, %v1345
    %v1347 = vrot.slane %v1346, 1
    %v1348 = vmax.f32 %v1346, %v1347
    %v1349 = vsel %vm295, %v1311, -inf
    %v1350 = vrot.slane %v1349, 4
    %v1351 = vmax.f32 %v1349, %v1350
    %v1352 = vrot.slane %v1351, 2
    %v1353 = vmax.f32 %v1351, %v1352
    %v1354 = vrot.slane %v1353, 1
    %v1355 = vmax.f32 %v1353, %v1354
    %v1356 = vsel %vm295, %v1312, -inf
    %v1357 = vrot.slane %v1356, 4
    %v1358 = vmax.f32 %v1356, %v1357
    %v1359 = vrot.slane %v1358, 2
    %v1360 = vmax.f32 %v1358, %v1359
    %v1361 = vrot.slane %v1360, 1
    %v1362 = vmax.f32 %v1360, %v1361
    %v1363 = vsel %vm295, %v1313, -inf
    %v1364 = vrot.slane %v1363, 4
    %v1365 = vmax.f32 %v1363, %v1364
    %v1366 = vrot.slane %v1365, 2
    %v1367 = vmax.f32 %v1365, %v1366
    %v1368 = vrot.slane %v1367, 1
    %v1369 = vmax.f32 %v1367, %v1368
    %v1370 = vsub.f32 %v1306, %v1320
    %v1371 = vsub.f32 %v1307, %v1327
    %v1372 = vsub.f32 %v1308, %v1334
    %v1373 = vsub.f32 %v1309, %v1341
    %v1374 = vsub.f32 %v1310, %v1348
    %v1375 = vsub.f32 %v1311, %v1355
    %v1376 = vsub.f32 %v1312, %v1362
    %v1377 = vsub.f32 %v1313, %v1369
    %v1378 = vmul.f32 %v1370, 1.442695
    %v1379 = vpow.pop %v1378
    %v1380 = vmul.f32 %v1371, 1.442695
    %v1381 = vpow.pop %v1380
    %v1382 = vmul.f32 %v1372, 1.442695
    %v1383 = vpow.pop %v1382
    %v1384 = vmul.f32 %v1373, 1.442695
    %v1385 = vpow.pop %v1384
    %v1386 = vmul.f32 %v1374, 1.442695
    %v1387 = vpow.pop %v1386
    %v1388 = vmul.f32 %v1375, 1.442695
    %v1389 = vpow.pop %v1388
    %v1390 = vmul.f32 %v1376, 1.442695
    %v1391 = vpow.pop %v1390
    %v1392 = vmul.f32 %v1377, 1.442695
    %v1393 = vpow.pop %v1392
    %v1394 = vsel %vm295, %v1379, 0.0
    %v1395 = vrot.slane %v1394, 4
    %v1396 = vadd.f32 %v1394, %v1395
    %v1397 = vrot.slane %v1396, 2
    %v1398 = vadd.f32 %v1396, %v1397
    %v1399 = vrot.slane %v1398, 1
    %v1400 = vadd.f32 %v1398, %v1399
    %v1401 = vsel %vm295, %v1381, 0.0
    %v1402 = vrot.slane %v1401, 4
    %v1403 = vadd.f32 %v1401, %v1402
    %v1404 = vrot.slane %v1403, 2
    %v1405 = vadd.f32 %v1403, %v1404
    %v1406 = vrot.slane %v1405, 1
    %v1407 = vadd.f32 %v1405, %v1406
    %v1408 = vsel %vm295, %v1383, 0.0
    %v1409 = vrot.slane %v1408, 4
    %v1410 = vadd.f32 %v1408, %v1409
    %v1411 = vrot.slane %v1410, 2
    %v1412 = vadd.f32 %v1410, %v1411
    %v1413 = vrot.slane %v1412, 1
    %v1414 = vadd.f32 %v1412, %v1413
    %v1415 = vsel %vm295, %v1385, 0.0
    %v1416 = vrot.slane %v1415, 4
    %v1417 = vadd.f32 %v1415, %v1416
    %v1418 = vrot.slane %v1417, 2
    %v1419 = vadd.f32 %v1417, %v1418
    %v1420 = vrot.slane %v1419, 1
    %v1421 = vadd.f32 %v1419, %v1420
    %v1422 = vsel %vm295, %v1387, 0.0
    %v1423 = vrot.slane %v1422, 4
    %v1424 = vadd.f32 %v1422, %v1423
    %v1425 = vrot.slane %v1424, 2
    %v1426 = vadd.f32 %v1424, %v1425
    %v1427 = vrot.slane %v1426, 1
    %v1428 = vadd.f32 %v1426, %v1427
    %v1429 = vsel %vm295, %v1389, 0.0
    %v1430 = vrot.slane %v1429, 4
    %v1431 = vadd.f32 %v1429, %v1430
    %v1432 = vrot.slane %v1431, 2
    %v1433 = vadd.f32 %v1431, %v1432
    %v1434 = vrot.slane %v1433, 1
    %v1435 = vadd.f32 %v1433, %v1434
    %v1436 = vsel %vm295, %v1391, 0.0
    %v1437 = vrot.slane %v1436, 4
    %v1438 = vadd.f32 %v1436, %v1437
    %v1439 = vrot.slane %v1438, 2
    %v1440 = vadd.f32 %v1438, %v1439
    %v1441 = vrot.slane %v1440, 1
    %v1442 = vadd.f32 %v1440, %v1441
    %v1443 = vsel %vm295, %v1393, 0.0
    %v1444 = vrot.slane %v1443, 4
    %v1445 = vadd.f32 %v1443, %v1444
    %v1446 = vrot.slane %v1445, 2
    %v1447 = vadd.f32 %v1445, %v1446
    %v1448 = vrot.slane %v1447, 1
    %v1449 = vadd.f32 %v1447, %v1448
    %v1450 = vrcp.pop %v1400
    %v1451 = vrcp.pop %v1407
    %v1452 = vrcp.pop %v1414
    %v1453 = vrcp.pop %v1421
    %v1454 = vrcp.pop %v1428
    %v1455 = vrcp.pop %v1435
    %v1456 = vrcp.pop %v1442
    %v1457 = vrcp.pop %v1449
    %v1458 = vmul.f32 %v1379, %v1450
    %v1459 = vmul.f32 %v1381, %v1451
    %v1460 = vmul.f32 %v1383, %v1452
    %v1461 = vmul.f32 %v1385, %v1453
    %v1462 = vmul.f32 %v1387, %v1454
    %v1463 = vmul.f32 %v1389, %v1455
    %v1464 = vmul.f32 %v1391, %v1456
    %v1465 = vmul.f32 %v1393, %v1457
    %1474 = vrot.lane.b32.xlu0 %v948, 64
    %v1475 = vpop.permute.xlu0 %1474
    %1476 = vrot.lane.b32.xlu0 %v951, 64
    %v1477 = vpop.permute.xlu0 %1476
    %1478 = vrot.lane.b32.xlu0 %v956, 64
    %v1479 = vpop.permute.xlu0 %1478
    %1480 = vrot.lane.b32.xlu0 %v959, 64
    %v1481 = vpop.permute.xlu0 %1480
    %1482 = vrot.lane.b32.xlu0 %v964, 64
    %v1483 = vpop.permute.xlu0 %1482
    %1484 = vrot.lane.b32.xlu0 %v967, 64
    %v1485 = vpop.permute.xlu0 %1484
    %1486 = vrot.lane.b32.xlu0 %v972, 64
    %v1487 = vpop.permute.xlu0 %1486
    %1488 = vrot.lane.b32.xlu0 %v975, 64
    %v1489 = vpop.permute.xlu0 %1488
    %v1498 = vmul.f32 %v1458, %v1475
    %v1499 = vmul.f32 %v1459, %v1477
    %v1500 = vmul.f32 %v1460, %v1479
    %v1501 = vmul.f32 %v1461, %v1481
    %v1502 = vmul.f32 %v1462, %v1483
    %v1503 = vmul.f32 %v1463, %v1485
    %v1504 = vmul.f32 %v1464, %v1487
    %v1505 = vmul.f32 %v1465, %v1489
    %v1506 = vsel %vm295, %v1498, 0.0
    %v1507 = vrot.slane %v1506, 4
    %v1508 = vadd.f32 %v1506, %v1507
    %v1509 = vrot.slane %v1508, 2
    %v1510 = vadd.f32 %v1508, %v1509
    %v1511 = vrot.slane %v1510, 1
    %v1512 = vadd.f32 %v1510, %v1511
    %v1513 = vsel %vm295, %v1499, 0.0
    %v1514 = vrot.slane %v1513, 4
    %v1515 = vadd.f32 %v1513, %v1514
    %v1516 = vrot.slane %v1515, 2
    %v1517 = vadd.f32 %v1515, %v1516
    %v1518 = vrot.slane %v1517, 1
    %v1519 = vadd.f32 %v1517, %v1518
    %v1520 = vsel %vm295, %v1500, 0.0
    %v1521 = vrot.slane %v1520, 4
    %v1522 = vadd.f32 %v1520, %v1521
    %v1523 = vrot.slane %v1522, 2
    %v1524 = vadd.f32 %v1522, %v1523
    %v1525 = vrot.slane %v1524, 1
    %v1526 = vadd.f32 %v1524, %v1525
    %v1527 = vsel %vm295, %v1501, 0.0
    %v1528 = vrot.slane %v1527, 4
    %v1529 = vadd.f32 %v1527, %v1528
    %v1530 = vrot.slane %v1529, 2
    %v1531 = vadd.f32 %v1529, %v1530
    %v1532 = vrot.slane %v1531, 1
    %v1533 = vadd.f32 %v1531, %v1532
    %v1534 = vsel %vm295, %v1502, 0.0
    %v1535 = vrot.slane %v1534, 4
    %v1536 = vadd.f32 %v1534, %v1535
    %v1537 = vrot.slane %v1536, 2
    %v1538 = vadd.f32 %v1536, %v1537
    %v1539 = vrot.slane %v1538, 1
    %v1540 = vadd.f32 %v1538, %v1539
    %v1541 = vsel %vm295, %v1503, 0.0
    %v1542 = vrot.slane %v1541, 4
    %v1543 = vadd.f32 %v1541, %v1542
    %v1544 = vrot.slane %v1543, 2
    %v1545 = vadd.f32 %v1543, %v1544
    %v1546 = vrot.slane %v1545, 1
    %v1547 = vadd.f32 %v1545, %v1546
    %v1548 = vsel %vm295, %v1504, 0.0
    %v1549 = vrot.slane %v1548, 4
    %v1550 = vadd.f32 %v1548, %v1549
    %v1551 = vrot.slane %v1550, 2
    %v1552 = vadd.f32 %v1550, %v1551
    %v1553 = vrot.slane %v1552, 1
    %v1554 = vadd.f32 %v1552, %v1553
    %v1555 = vsel %vm295, %v1505, 0.0
    %v1556 = vrot.slane %v1555, 4
    %v1557 = vadd.f32 %v1555, %v1556
    %v1558 = vrot.slane %v1557, 2
    %v1559 = vadd.f32 %v1557, %v1558
    %v1560 = vrot.slane %v1559, 1
    %v1561 = vadd.f32 %v1559, %v1560
    %v1562 = vpack.c.bf16 %v1512, %v1512
    %v1563 = vpack.c.bf16 %v1519, %v1519
    %v1564 = vpack.c.bf16 %v1526, %v1526
    %v1565 = vpack.c.bf16 %v1533, %v1533
    %v1566 = vpack.c.bf16 %v1540, %v1540
    %v1567 = vpack.c.bf16 %v1547, %v1547
    %v1568 = vpack.c.bf16 %v1554, %v1554
    %v1569 = vpack.c.bf16 %v1561, %v1561
    %s1570 = scalar_lea.vmem [#allocation7], 160
    %v1571 = vld [vmem:[%s1570] sm:$0xf]
    %v1572 = vld [vmem:[%s1570 + $0x4] sm:$0xf]
    %v1573 = vld [vmem:[%s1570 + $0x8] sm:$0xf]
    %v1574 = vld [vmem:[%s1570 + $0xc] sm:$0xf]
    %v1575 = vld [vmem:[%s1570 + $0x10] sm:$0xf]
    %v1576 = vld [vmem:[%s1570 + $0x14] sm:$0xf]
    %v1577 = vld [vmem:[%s1570 + $0x18] sm:$0xf]
    %v1578 = vld [vmem:[%s1570 + $0x1c] sm:$0xf]
    %v1587 = vunpack.c.l.b16 %v1562
    %v1588 = vunpack.c.l.b16 %v1563
    %v1589 = vunpack.c.l.b16 %v1564
    %v1590 = vunpack.c.l.b16 %v1565
    %v1591 = vunpack.c.l.b16 %v1566
    %v1592 = vunpack.c.l.b16 %v1567
    %v1593 = vunpack.c.l.b16 %v1568
    %v1594 = vunpack.c.l.b16 %v1569
    %v1595 = vsel %vm548, %v1588, %v1587
    %v1596 = vsel %vm551, %v1589, %v1595
    %v1597 = vsel %vm554, %v1590, %v1596
    %v1598 = vsel %vm557, %v1591, %v1597
    %v1599 = vsel %vm560, %v1592, %v1598
    %v1600 = vsel %vm563, %v1593, %v1599
    %v1601 = vsel %vm566, %v1594, %v1600
    %v1602 = vpack.c.b16 %v1601, %v1601
    %v1611 = vunpack.c.l.b16 %v1571
    %v1612 = vunpack.c.l.b16 %v1572
    %v1613 = vunpack.c.l.b16 %v1573
    %v1614 = vunpack.c.l.b16 %v1574
    %v1615 = vunpack.c.l.b16 %v1575
    %v1616 = vunpack.c.l.b16 %v1576
    %v1617 = vunpack.c.l.b16 %v1577
    %v1618 = vunpack.c.l.b16 %v1578
    %v1619 = vpack.c.b16 %v1612, %v1611
    %v1620 = vpack.c.b16 %v1614, %v1613
    %v1621 = vpack.c.b16 %v1616, %v1615
    %v1622 = vpack.c.b16 %v1618, %v1617
    %v1628 = vsel %vm295, %v1602, 0
    %1630 = vmatprep.subr.bf16.mxu0 0
    %1631 = vmatpush1.bf16.msra.mxu0 %v1619
    %1632 = vmatprep.subr.bf16.mxu0 0
    %1633 = vmatpush1.bf16.msra.mxu0 %v1620
    %1634 = vmatprep.subr.bf16.mxu0 0
    %1635 = vmatpush1.bf16.msra.mxu0 %v1621
    %1636 = vmatprep.subr.bf16.mxu0 0
    %1637 = vmatpush1.bf16.msra.mxu0 %v1622
    %1638 = vmatprep.subr.bf16.mxu0 0
    %1639 = vmatpush1.bf16.msra.mxu0 0
    %1640 = vmatprep.subr.bf16.mxu0 0
    %1641 = vmatpush1.bf16.msra.mxu0 0
    %1642 = vmatprep.subr.bf16.mxu0 0
    %1643 = vmatpush1.bf16.msra.mxu0 0
    %1644 = vmatprep.subr.bf16.mxu0 0
    %1645 = vmatpush1.bf16.msra.mxu0 0
    %1646 = vmatprep.subr.bf16.mxu0 0
    %1647 = vmatpush1.bf16.msra.mxu0 0
    %1648 = vmatprep.subr.bf16.mxu0 0
    %1649 = vmatpush1.bf16.msra.mxu0 0
    %1650 = vmatprep.subr.bf16.mxu0 0
    %1651 = vmatpush1.bf16.msra.mxu0 0
    %1652 = vmatprep.subr.bf16.mxu0 0
    %1653 = vmatpush1.bf16.msra.mxu0 0
    %1654 = vmatprep.subr.bf16.mxu0 0
    %1655 = vmatpush1.bf16.msra.mxu0 0
    %1656 = vmatprep.subr.bf16.mxu0 0
    %1657 = vmatpush1.bf16.msra.mxu0 0
    %1658 = vmatprep.subr.bf16.mxu0 0
    %1659 = vmatpush1.bf16.msra.mxu0 0
    %1660 = vmatprep.subr.bf16.mxu0 0
    %1661 = vmatpush1.bf16.msra.mxu0 0
    %1662 = vmatprep.mubr.bf16.mxu0 0
    %1663 = vmatmul.mubr.bf16.gmra.mrb[0].mxu0 %v1628
    %v1664 = vpop.f32.mrb[0].mxu0
    %v1665 = vadd.f32 %v761, %v1664
    %v1666 = vpop.f32.mrb[0].mxu0
    %v1667 = vpop.f32.mrb[0].mxu0
    %v1668 = vpop.f32.mrb[0].mxu0
    %1669 = vdwg.mxu0
    %v1670 = vmul.f32 %v1665, 0.5
    %s1671 = scalar_lea.vmem [#allocation7], 192
    %v1672 = vld [vmem:[%s1671] sm:$0xf]
    %v1673 = vld [vmem:[%s1671 + $0x4] sm:$0xf]
    %v1674 = vld [vmem:[%s1671 + $0x8] sm:$0xf]
    %v1675 = vld [vmem:[%s1671 + $0xc] sm:$0xf]
    %v1676 = vld [vmem:[%s1671 + $0x10] sm:$0xf]
    %v1677 = vld [vmem:[%s1671 + $0x14] sm:$0xf]
    %v1678 = vld [vmem:[%s1671 + $0x18] sm:$0xf]
    %v1679 = vld [vmem:[%s1671 + $0x1c] sm:$0xf]
    %v1680 = vld [vmem:[#allocation10 + $0x6] sm:$0x1]
    %s1681 = scalar_lea.vmem [#allocation7], 224
    %v1682 = vld [vmem:[%s1681] sm:$0xf]
    %v1683 = vld [vmem:[%s1681 + $0x4] sm:$0xf]
    %v1684 = vld [vmem:[%s1681 + $0x8] sm:$0xf]
    %v1685 = vld [vmem:[%s1681 + $0xc] sm:$0xf]
    %v1686 = vld [vmem:[%s1681 + $0x10] sm:$0xf]
    %v1687 = vld [vmem:[%s1681 + $0x14] sm:$0xf]
    %v1688 = vld [vmem:[%s1681 + $0x18] sm:$0xf]
    %v1689 = vld [vmem:[%s1681 + $0x1c] sm:$0xf]
    %v1690 = vld [vmem:[#allocation10 + $0x7] sm:$0x1]
    %s1691 = scalar_lea.vmem [#allocation7], 256
    %v1692 = vld [vmem:[%s1691] sm:$0xf]
    %v1693 = vld [vmem:[%s1691 + $0x4] sm:$0xf]
    %v1694 = vld [vmem:[%s1691 + $0x8] sm:$0xf]
    %v1695 = vld [vmem:[%s1691 + $0xc] sm:$0xf]
    %v1696 = vld [vmem:[%s1691 + $0x10] sm:$0xf]
    %v1697 = vld [vmem:[%s1691 + $0x14] sm:$0xf]
    %v1698 = vld [vmem:[%s1691 + $0x18] sm:$0xf]
    %v1699 = vld [vmem:[%s1691 + $0x1c] sm:$0xf]
    %v1700 = vld [vmem:[#allocation10 + $0x8] sm:$0x1]
    %v1701 = vpack.c.bf16 %v1670, %v1670
    %v1702 = vlaneseq
    %v1703 = vshrl.u32 %v1702, 7
    %v1704 = vsub.s32 0, %v1703
    %v1705 = vrot.slane %v1680, %v1704
    %v1714 = vunpack.c.l.b16 %v1672
    %v1715 = vunpack.c.l.b16 %v1673
    %v1716 = vunpack.c.l.b16 %v1674
    %v1717 = vunpack.c.l.b16 %v1675
    %v1718 = vunpack.c.l.b16 %v1676
    %v1719 = vunpack.c.l.b16 %v1677
    %v1720 = vunpack.c.l.b16 %v1678
    %v1721 = vunpack.c.l.b16 %v1679
    %v1722 = vpack.c.b16 %v1715, %v1714
    %v1723 = vpack.c.b16 %v1717, %v1716
    %v1724 = vpack.c.b16 %v1719, %v1718
    %v1725 = vpack.c.b16 %v1721, %v1720
    %v1731 = vsel %vm295, %v1701, 0
    %1733 = vmatprep.subr.bf16.mxu0 0
    %1734 = vmatpush1.bf16.msra.mxu0 %v1722
    %1735 = vmatprep.subr.bf16.mxu0 0
    %1736 = vmatpush1.bf16.msra.mxu0 %v1723
    %1737 = vmatprep.subr.bf16.mxu0 0
    %1738 = vmatpush1.bf16.msra.mxu0 %v1724
    %1739 = vmatprep.subr.bf16.mxu0 0
    %1740 = vmatpush1.bf16.msra.mxu0 %v1725
    %1741 = vmatprep.subr.bf16.mxu0 0
    %1742 = vmatpush1.bf16.msra.mxu0 0
    %1743 = vmatprep.subr.bf16.mxu0 0
    %1744 = vmatpush1.bf16.msra.mxu0 0
    %1745 = vmatprep.subr.bf16.mxu0 0
    %1746 = vmatpush1.bf16.msra.mxu0 0
    %1747 = vmatprep.subr.bf16.mxu0 0
    %1748 = vmatpush1.bf16.msra.mxu0 0
    %1749 = vmatprep.subr.bf16.mxu0 0
    %1750 = vmatpush1.bf16.msra.mxu0 0
    %1751 = vmatprep.subr.bf16.mxu0 0
    %1752 = vmatpush1.bf16.msra.mxu0 0
    %1753 = vmatprep.subr.bf16.mxu0 0
    %1754 = vmatpush1.bf16.msra.mxu0 0
    %1755 = vmatprep.subr.bf16.mxu0 0
    %1756 = vmatpush1.bf16.msra.mxu0 0
    %1757 = vmatprep.subr.bf16.mxu0 0
    %1758 = vmatpush1.bf16.msra.mxu0 0
    %1759 = vmatprep.subr.bf16.mxu0 0
    %1760 = vmatpush1.bf16.msra.mxu0 0
    %1761 = vmatprep.subr.bf16.mxu0 0
    %1762 = vmatpush1.bf16.msra.mxu0 0
    %1763 = vmatprep.subr.bf16.mxu0 0
    %1764 = vmatpush1.bf16.msra.mxu0 0
    %1765 = vmatprep.mubr.bf16.mxu0 0
    %1766 = vmatmul.mubr.bf16.gmra.mrb[0].mxu0 %v1731
    %v1767 = vpop.f32.mrb[0].mxu0
    %v1768 = vadd.f32 %v1705, %v1767
    %v1769 = vpop.f32.mrb[0].mxu0
    %v1770 = vpop.f32.mrb[0].mxu0
    %v1771 = vpop.f32.mrb[0].mxu0
    %1772 = vdwg.mxu0
    %v1773 = vmax.f32 %v1768, 0.0
    %v1774 = vpack.c.bf16 %v1773, %v1773
    %v1775 = vlaneseq
    %v1776 = vshrl.u32 %v1775, 7
    %v1777 = vsub.s32 0, %v1776
    %v1778 = vrot.slane %v1690, %v1777
    %v1787 = vunpack.c.l.b16 %v1682
    %v1788 = vunpack.c.l.b16 %v1683
    %v1789 = vunpack.c.l.b16 %v1684
    %v1790 = vunpack.c.l.b16 %v1685
    %v1791 = vunpack.c.l.b16 %v1686
    %v1792 = vunpack.c.l.b16 %v1687
    %v1793 = vunpack.c.l.b16 %v1688
    %v1794 = vunpack.c.l.b16 %v1689
    %v1795 = vpack.c.b16 %v1788, %v1787
    %v1796 = vpack.c.b16 %v1790, %v1789
    %v1797 = vpack.c.b16 %v1792, %v1791
    %v1798 = vpack.c.b16 %v1794, %v1793
    %v1804 = vsel %vm295, %v1774, 0
    %1806 = vmatprep.subr.bf16.mxu0 0
    %1807 = vmatpush1.bf16.msra.mxu0 %v1795
    %1808 = vmatprep.subr.bf16.mxu0 0
    %1809 = vmatpush1.bf16.msra.mxu0 %v1796
    %1810 = vmatprep.subr.bf16.mxu0 0
    %1811 = vmatpush1.bf16.msra.mxu0 %v1797
    %1812 = vmatprep.subr.bf16.mxu0 0
    %1813 = vmatpush1.bf16.msra.mxu0 %v1798
    %1814 = vmatprep.subr.bf16.mxu0 0
    %1815 = vmatpush1.bf16.msra.mxu0 0
    %1816 = vmatprep.subr.bf16.mxu0 0
    %1817 = vmatpush1.bf16.msra.mxu0 0
    %1818 = vmatprep.subr.bf16.mxu0 0
    %1819 = vmatpush1.bf16.msra.mxu0 0
    %1820 = vmatprep.subr.bf16.mxu0 0
    %1821 = vmatpush1.bf16.msra.mxu0 0
    %1822 = vmatprep.subr.bf16.mxu0 0
    %1823 = vmatpush1.bf16.msra.mxu0 0
    %1824 = vmatprep.subr.bf16.mxu0 0
    %1825 = vmatpush1.bf16.msra.mxu0 0
    %1826 = vmatprep.subr.bf16.mxu0 0
    %1827 = vmatpush1.bf16.msra.mxu0 0
    %1828 = vmatprep.subr.bf16.mxu0 0
    %1829 = vmatpush1.bf16.msra.mxu0 0
    %1830 = vmatprep.subr.bf16.mxu0 0
    %1831 = vmatpush1.bf16.msra.mxu0 0
    %1832 = vmatprep.subr.bf16.mxu0 0
    %1833 = vmatpush1.bf16.msra.mxu0 0
    %1834 = vmatprep.subr.bf16.mxu0 0
    %1835 = vmatpush1.bf16.msra.mxu0 0
    %1836 = vmatprep.subr.bf16.mxu0 0
    %1837 = vmatpush1.bf16.msra.mxu0 0
    %1838 = vmatprep.mubr.bf16.mxu0 0
    %1839 = vmatmul.mubr.bf16.gmra.mrb[0].mxu0 %v1804
    %v1840 = vpop.f32.mrb[0].mxu0
    %v1841 = vadd.f32 %v1778, %v1840
    %v1842 = vpop.f32.mrb[0].mxu0
    %v1843 = vpop.f32.mrb[0].mxu0
    %v1844 = vpop.f32.mrb[0].mxu0
    %1845 = vdwg.mxu0
    %v1846 = vmax.f32 %v1841, 0.0
    %v1847 = vpack.c.bf16 %v1846, %v1846
    %v1848 = vlaneseq
    %v1849 = vshrl.u32 %v1848, 7
    %v1850 = vsub.s32 0, %v1849
    %v1851 = vrot.slane %v1700, %v1850
    %v1860 = vunpack.c.l.b16 %v1692
    %v1861 = vunpack.c.l.b16 %v1693
    %v1862 = vunpack.c.l.b16 %v1694
    %v1863 = vunpack.c.l.b16 %v1695
    %v1864 = vunpack.c.l.b16 %v1696
    %v1865 = vunpack.c.l.b16 %v1697
    %v1866 = vunpack.c.l.b16 %v1698
    %v1867 = vunpack.c.l.b16 %v1699
    %v1868 = vpack.c.b16 %v1861, %v1860
    %v1869 = vpack.c.b16 %v1863, %v1862
    %v1870 = vpack.c.b16 %v1865, %v1864
    %v1871 = vpack.c.b16 %v1867, %v1866
    %v1877 = vsel %vm295, %v1847, 0
    %1879 = vmatprep.subr.bf16.mxu0 0
    %1880 = vmatpush1.bf16.msra.mxu0 %v1868
    %1881 = vmatprep.subr.bf16.mxu0 0
    %1882 = vmatpush1.bf16.msra.mxu0 %v1869
    %1883 = vmatprep.subr.bf16.mxu0 0
    %1884 = vmatpush1.bf16.msra.mxu0 %v1870
    %1885 = vmatprep.subr.bf16.mxu0 0
    %1886 = vmatpush1.bf16.msra.mxu0 %v1871
    %1887 = vmatprep.subr.bf16.mxu0 0
    %1888 = vmatpush1.bf16.msra.mxu0 0
    %1889 = vmatprep.subr.bf16.mxu0 0
    %1890 = vmatpush1.bf16.msra.mxu0 0
    %1891 = vmatprep.subr.bf16.mxu0 0
    %1892 = vmatpush1.bf16.msra.mxu0 0
    %1893 = vmatprep.subr.bf16.mxu0 0
    %1894 = vmatpush1.bf16.msra.mxu0 0
    %1895 = vmatprep.subr.bf16.mxu0 0
    %1896 = vmatpush1.bf16.msra.mxu0 0
    %1897 = vmatprep.subr.bf16.mxu0 0
    %1898 = vmatpush1.bf16.msra.mxu0 0
    %1899 = vmatprep.subr.bf16.mxu0 0
    %1900 = vmatpush1.bf16.msra.mxu0 0
    %1901 = vmatprep.subr.bf16.mxu0 0
    %1902 = vmatpush1.bf16.msra.mxu0 0
    %1903 = vmatprep.subr.bf16.mxu0 0
    %1904 = vmatpush1.bf16.msra.mxu0 0
    %1905 = vmatprep.subr.bf16.mxu0 0
    %1906 = vmatpush1.bf16.msra.mxu0 0
    %1907 = vmatprep.subr.bf16.mxu0 0
    %1908 = vmatpush1.bf16.msra.mxu0 0
    %1909 = vmatprep.subr.bf16.mxu0 0
    %1910 = vmatpush1.bf16.msra.mxu0 0
    %1911 = vmatprep.mubr.bf16.mxu0 0
    %1912 = vmatmul.mubr.bf16.gmra.mrb[0].mxu0 %v1877
    %v1913 = vpop.f32.mrb[0].mxu0
    %v1914 = vadd.f32 %v1851, %v1913
    %v1915 = vpop.f32.mrb[0].mxu0
    %v1916 = vpop.f32.mrb[0].mxu0
    %v1917 = vpop.f32.mrb[0].mxu0
    %1918 = vdwg.mxu0
    %v1919 = vmax.f32 %v1914, 0.0
    %v1920 = vpack.c.bf16 %v1919, %v1919
    %v1921 = vld [vmem:[#allocation11] sm:$0xf]
    %v1922 = vld [vmem:[#allocation11 + $0x4] sm:$0xf]
    %v1923 = vld [vmem:[#allocation11 + $0x8] sm:$0xf]
    %v1924 = vld [vmem:[#allocation11 + $0xc] sm:$0xf]
    %v1925 = vld [vmem:[#allocation11 + $0x10] sm:$0xf]
    %v1926 = vld [vmem:[#allocation11 + $0x14] sm:$0xf]
    %v1927 = vld [vmem:[#allocation11 + $0x18] sm:$0xf]
    %v1928 = vld [vmem:[#allocation11 + $0x1c] sm:$0xf]
    %v1929 = vld [vmem:[%s6] sm:$0x1]
    %v1931 = vlaneseq
    %v1932 = vshrl.u32 %v1931, 7
    %v1933 = vsub.s32 0, %v1932
    %v1934 = vrot.slane %v1929, %v1933
    %v1944 = vunpack.c.l.b16 %v1921
    %v1945 = vunpack.c.l.b16 %v1922
    %v1946 = vunpack.c.l.b16 %v1923
    %v1947 = vunpack.c.l.b16 %v1924
    %v1948 = vunpack.c.l.b16 %v1925
    %v1949 = vunpack.c.l.b16 %v1926
    %v1950 = vunpack.c.l.b16 %v1927
    %v1951 = vunpack.c.l.b16 %v1928
    %v1952 = vpack.c.b16 %v1945, %v1944
    %v1953 = vpack.c.b16 %v1947, %v1946
    %v1954 = vpack.c.b16 %v1949, %v1948
    %v1955 = vpack.c.b16 %v1951, %v1950
    %v1961 = vsel %vm295, %v1920, 0
    %1963 = vmatprep.subr.bf16.mxu0 0
    %1964 = vmatpush1.bf16.msra.mxu0 %v1952
    %1965 = vmatprep.subr.bf16.mxu0 0
    %1966 = vmatpush1.bf16.msra.mxu0 %v1953
    %1967 = vmatprep.subr.bf16.mxu0 0
    %1968 = vmatpush1.bf16.msra.mxu0 %v1954
    %1969 = vmatprep.subr.bf16.mxu0 0
    %1970 = vmatpush1.bf16.msra.mxu0 %v1955
    %1971 = vmatprep.subr.bf16.mxu0 0
    %1972 = vmatpush1.bf16.msra.mxu0 0
    %1973 = vmatprep.subr.bf16.mxu0 0
    %1974 = vmatpush1.bf16.msra.mxu0 0
    %1975 = vmatprep.subr.bf16.mxu0 0
    %1976 = vmatpush1.bf16.msra.mxu0 0
    %1977 = vmatprep.subr.bf16.mxu0 0
    %1978 = vmatpush1.bf16.msra.mxu0 0
    %1979 = vmatprep.subr.bf16.mxu0 0
    %1980 = vmatpush1.bf16.msra.mxu0 0
    %1981 = vmatprep.subr.bf16.mxu0 0
    %1982 = vmatpush1.bf16.msra.mxu0 0
    %1983 = vmatprep.subr.bf16.mxu0 0
    %1984 = vmatpush1.bf16.msra.mxu0 0
    %1985 = vmatprep.subr.bf16.mxu0 0
    %1986 = vmatpush1.bf16.msra.mxu0 0
    %1987 = vmatprep.subr.bf16.mxu0 0
    %1988 = vmatpush1.bf16.msra.mxu0 0
    %1989 = vmatprep.subr.bf16.mxu0 0
    %1990 = vmatpush1.bf16.msra.mxu0 0
    %1991 = vmatprep.subr.bf16.mxu0 0
    %1992 = vmatpush1.bf16.msra.mxu0 0
    %1993 = vmatprep.subr.bf16.mxu0 0
    %1994 = vmatpush1.bf16.msra.mxu0 0
    %1995 = vmatprep.mubr.bf16.mxu0 0
    %1996 = vmatmul.mubr.bf16.gmra.mrb[0].mxu0 %v1961
    %v1997 = vpop.f32.mrb[0].mxu0
    %v1998 = vadd.f32 %v1934, %v1997
    %v1999 = vpop.f32.mrb[0].mxu0
    %v2000 = vpop.f32.mrb[0].mxu0
    %v2001 = vpop.f32.mrb[0].mxu0
    %2002 = vdwg.mxu0
    %vm2003 = vcmask 39936
    %2004 = vst.msk [vmem:[#allocation14] sm:$0xff] %vm2003, %v1998
    // Predicated region
    $region62: #{tpu_custom_call.1} parent=1 // pred_check
      _
    $region63: #{tpu_custom_call.1} parent=1 // pred_check_branch
      %2006 = sbr.rel (0) target = $region65
    $region64: #{tpu_custom_call.1} parent=1 // pred_region
      %s2008 = ssub.s32 128, 128
      %2009 = vsyncadd [#allocation4], %s2008
      %s2011 = sshll.u32 [#allocation14], 4
      %s2012 = int_to_ptr.vmem [resolvable:$true] %s2011
      %2014 = dma.vmem_to_hbm [thread:$0]  %s2012, 128, %s8, [#allocation4]
    $region65: #{tpu_custom_call.1} parent=1 // pred_fallthru
      _
    // Predicated region
    $region66: #{tpu_custom_call.1} parent=1 // pred_check
      _
    $region67: #{tpu_custom_call.1} parent=1 // pred_check_branch
      %2016 = sbr.rel (0) target = $region69
    $region68: #{tpu_custom_call.1} parent=1 // pred_region
      %2017 = dma.done [#allocation4], 128
    $region69: #{tpu_custom_call.1} parent=1 // pred_fallthru
      _
    %2018 = vsyncpa [#allocation3], 1
    %2019 = vsyncpa [#allocation6], 1
    %2020 = vsyncpa [#allocation9], 1
    %2021 = vsyncpa [#allocation12], 1
    %2022 = vsyncpa [#allocation4], 1

</llo_original>
